<compile_context>
chip_gen: v5e
topology: v5e:2x2
jax: 0.10.0
libtpu: 0.0.40
codegen_flags: <defaults>
</compile_context>

<pallas_src>
import math

import jax
import jax.numpy as jnp
from jax.experimental import pallas as pl
from jax.experimental.pallas import tpu as pltpu

# ---- model hyper-params (small, consistent with the module signature) -------
VOCAB = 50
VOCAB_PAD = 64              # embedding rows padded for sublane alignment
D_MODEL = 32
N_HEADS = 4
D_HEAD = D_MODEL // N_HEADS
D_FF = 64
N_LAYERS = 2
BATCH = 2
SEQ = 8
BS = BATCH * SEQ
EPS_SUBLAYER = 1e-6         # annotated-transformer LayerNorm eps (sub-layers)
EPS_FINAL = 1e-5            # nn.LayerNorm default eps (final norm)

LANES = 128

# ---- parameter-slab row layout (all blocks 8-row aligned, 128 lanes, f32) ----
OFF_EMB = 0                                   # (VOCAB_PAD, :D)  embedding
OFF_PE = OFF_EMB + VOCAB_PAD                  # (BS, :D)         pos. enc. (pre-tiled)
OFF_LAYER = OFF_PE + ((BS + 7) // 8) * 8      # per-layer blocks start here
L_WQKV = 0                                    # (D, :128)  fused QKV (cols 96:128 zero)
L_WO = D_MODEL                                # (D, :D)    attn output proj
L_W1 = 2 * D_MODEL                            # (D, :D_FF) FFN in
L_W2 = 3 * D_MODEL                            # (D_FF, :D) FFN out
L_VEC = 3 * D_MODEL + D_FF                    # 8 rows of (1, ...) vectors
(V_LN1_G, V_LN1_B, V_LN2_G, V_LN2_B,
 V_BQKV, V_BO, V_B1, V_B2) = range(8)
LAYER_ROWS = L_VEC + 8
OFF_FIN = OFF_LAYER + N_LAYERS * LAYER_ROWS   # row +0: final gamma, +1: final beta
TOTAL_ROWS = OFF_FIN + 8


def _vmem():
    return pl.BlockSpec(memory_space=pltpu.MemorySpace.VMEM)


# ------------------------------ LayerNorm flavors ------------------------------
def _ln_annotated(x, g, b):
    # Annotated-Transformer LayerNorm: g * (x - mean) / (std_unbiased + eps) + b
    mean = jnp.mean(x, axis=-1, keepdims=True)
    xc = x - mean
    var = jnp.sum(xc * xc, axis=-1, keepdims=True) * (1.0 / (D_MODEL - 1))
    return g * xc / (jnp.sqrt(var) + EPS_SUBLAYER) + b


def _ln_torch(x, g, b):
    # torch nn.LayerNorm: (x - mean) * rsqrt(var_biased + eps) * g + b
    mean = jnp.mean(x, axis=-1, keepdims=True)
    xc = x - mean
    var = jnp.mean(xc * xc, axis=-1, keepdims=True)
    return xc * jax.lax.rsqrt(var + EPS_FINAL) * g + b


# --------------------------- fused encoder kernel -----------------------------
def encoder_fused_kernel(ids_ref, bias_ref, slab_ref, o_ref):
    scale = 1.0 / math.sqrt(D_HEAD)

    # ---- embedding gather as one-hot matmul (MXU path, no dynamic gather) ----
    ids = ids_ref[...]                                              # (BS, 1) i32
    iota = jax.lax.broadcasted_iota(jnp.int32, (BS, VOCAB_PAD), 1)
    onehot = (iota == ids).astype(jnp.float32)                      # (BS, 64)
    emb = slab_ref[OFF_EMB:OFF_EMB + VOCAB_PAD, 0:D_MODEL]          # (64, D)
    x = jnp.dot(onehot, emb, preferred_element_type=jnp.float32)    # (BS, D)
    x = x + slab_ref[OFF_PE:OFF_PE + BS, 0:D_MODEL]                 # + positional

    # ---- key-padding bias, hoisted & broadcast ONCE to (H*B, S, S) ----
    # batched-head index n = h * BATCH + b (matches the head fold below)
    bias = jnp.broadcast_to(
        bias_ref[...].reshape(1, BATCH, 1, SEQ),
        (N_HEADS, BATCH, SEQ, SEQ)).reshape(N_HEADS * BATCH, SEQ, SEQ)

    for l in range(N_LAYERS):
        base = OFF_LAYER + l * LAYER_ROWS
        vb = base + L_VEC

        # ---- sub-layer 0: x + SelfAttn(LN(x)) ----
        xn = _ln_annotated(
            x,
            slab_ref[vb + V_LN1_G:vb + V_LN1_G + 1, 0:D_MODEL],
            slab_ref[vb + V_LN1_B:vb + V_LN1_B + 1, 0:D_MODEL])
        # fused QKV projection over a full-128-lane weight block (cols 96:128 zero)
        qkv = (jnp.dot(xn, slab_ref[base + L_WQKV:base + L_WQKV + D_MODEL, :],
                       preferred_element_type=jnp.float32)
               + slab_ref[vb + V_BQKV:vb + V_BQKV + 1, :])           # (BS, 128)

        def fold_heads(col0):
            # lane block (BS, D) -> (H*B, S, Dh), batch index n = h*B + b
            return jnp.concatenate(
                [qkv[:, col0 + h * D_HEAD:col0 + (h + 1) * D_HEAD]
                     .reshape(BATCH, SEQ, D_HEAD)
                 for h in range(N_HEADS)], axis=0)

        q = fold_heads(0)
        k = fold_heads(D_MODEL)
        v = fold_heads(2 * D_MODEL)

        # one batched score einsum / softmax / context einsum for all heads
        sc = jnp.einsum("nqd,nkd->nqk", q, k,
                        preferred_element_type=jnp.float32) * scale + bias
        m = jnp.max(sc, axis=-1, keepdims=True)
        p = jnp.exp(sc - m)
        p = p / jnp.sum(p, axis=-1, keepdims=True)        # exact division
        ctx = jnp.einsum("nqk,nkd->nqd", p, v,
                         preferred_element_type=jnp.float32)         # (H*B, S, Dh)
        # unfold heads back onto lanes: (H*B, S, Dh) -> (BS, D)
        attn = jnp.concatenate(
            [ctx[h * BATCH:(h + 1) * BATCH] for h in range(N_HEADS)],
            axis=-1).reshape(BS, D_MODEL)

        x = (x
             + jnp.dot(attn,
                       slab_ref[base + L_WO:base + L_WO + D_MODEL, 0:D_MODEL],
                       preferred_element_type=jnp.float32)
             + slab_ref[vb + V_BO:vb + V_BO + 1, 0:D_MODEL])

        # ---- sub-layer 1: x + FFN(LN(x)) ----
        xn = _ln_annotated(
            x,
            slab_ref[vb + V_LN2_G:vb + V_LN2_G + 1, 0:D_MODEL],
            slab_ref[vb + V_LN2_B:vb + V_LN2_B + 1, 0:D_MODEL])
        h1 = (jnp.dot(xn, slab_ref[base + L_W1:base + L_W1 + D_MODEL, 0:D_FF],
                      preferred_element_type=jnp.float32)
              + slab_ref[vb + V_B1:vb + V_B1 + 1, 0:D_FF])
        h1 = jnp.maximum(h1, 0.0)
        x = (x
             + jnp.dot(h1, slab_ref[base + L_W2:base + L_W2 + D_FF, 0:D_MODEL],
                       preferred_element_type=jnp.float32)
             + slab_ref[vb + V_B2:vb + V_B2 + 1, 0:D_MODEL])

    # ---- final LayerNorm (torch nn.LayerNorm semantics) ----
    o_ref[...] = _ln_torch(
        x,
        slab_ref[OFF_FIN:OFF_FIN + 1, 0:D_MODEL],
        slab_ref[OFF_FIN + 1:OFF_FIN + 2, 0:D_MODEL]).astype(o_ref.dtype)


# ----------------------------- parameter handling ------------------------------
def positional_encoding(seq_len, d_model):
    pos = jnp.arange(seq_len, dtype=jnp.float32)[:, None]
    div = jnp.exp(jnp.arange(0, d_model, 2, dtype=jnp.float32)
                  * (-math.log(10000.0) / d_model))
    pe = jnp.zeros((seq_len, d_model), jnp.float32)
    pe = pe.at[:, 0::2].set(jnp.sin(pos * div))
    pe = pe.at[:, 1::2].set(jnp.cos(pos * div))
    return pe  # (S, D)


def _linear_params(key, d_in, d_out):
    kw, kb = jax.random.split(key)
    bound = 1.0 / math.sqrt(d_in)
    w = jax.random.uniform(kw, (d_in, d_out), jnp.float32, -bound, bound)
    b = jax.random.uniform(kb, (1, d_out), jnp.float32, -bound, bound)
    return w, b


def init_params(key):
    keys = jax.random.split(key, 1 + 6 * N_LAYERS)
    params = {"emb": jax.random.normal(keys[0], (VOCAB, D_MODEL), jnp.float32),
              "layers": []}
    ki = 1
    for _ in range(N_LAYERS):
        wq, bq = _linear_params(keys[ki + 0], D_MODEL, D_MODEL)
        wk, bk = _linear_params(keys[ki + 1], D_MODEL, D_MODEL)
        wv, bv = _linear_params(keys[ki + 2], D_MODEL, D_MODEL)
        wo, bo = _linear_params(keys[ki + 3], D_MODEL, D_MODEL)
        w1, b1 = _linear_params(keys[ki + 4], D_MODEL, D_FF)
        w2, b2 = _linear_params(keys[ki + 5], D_FF, D_MODEL)
        ki += 6
        params["layers"].append(dict(
            # fused QKV projection: one (D, 3D) matmul instead of three (D, D)
            wqkv=jnp.concatenate([wq, wk, wv], axis=1),
            bqkv=jnp.concatenate([bq, bk, bv], axis=1),
            wo=wo, bo=bo, w1=w1, b1=b1, w2=w2, b2=b2,
            ln1_g=jnp.ones((1, D_MODEL), jnp.float32),
            ln1_b=jnp.zeros((1, D_MODEL), jnp.float32),
            ln2_g=jnp.ones((1, D_MODEL), jnp.float32),
            ln2_b=jnp.zeros((1, D_MODEL), jnp.float32)))
    params["final_g"] = jnp.ones((1, D_MODEL), jnp.float32)
    params["final_b"] = jnp.zeros((1, D_MODEL), jnp.float32)
    return params


def pack_params(params):
    """Pack every weight/bias (+ pre-tiled positional encoding) into ONE
    zero-initialized (TOTAL_ROWS, 128) f32 slab -> a single HBM->VMEM DMA."""
    slab = jnp.zeros((TOTAL_ROWS, LANES), jnp.float32)

    def put(s, arr, r, c=0):
        return s.at[r:r + arr.shape[0], c:c + arr.shape[1]].set(arr)

    slab = put(slab, params["emb"], OFF_EMB)
    pe = positional_encoding(SEQ, D_MODEL)
    pe_tiled = jnp.broadcast_to(pe[None], (BATCH, SEQ, D_MODEL)).reshape(BS, D_MODEL)
    slab = put(slab, pe_tiled, OFF_PE)
    for l, lp in enumerate(params["layers"]):
        base = OFF_LAYER + l * LAYER_ROWS
        vb = base + L_VEC
        slab = put(slab, lp["wqkv"], base + L_WQKV)
        slab = put(slab, lp["wo"], base + L_WO)
        slab = put(slab, lp["w1"], base + L_W1)
        slab = put(slab, lp["w2"], base + L_W2)
        slab = put(slab, lp["ln1_g"], vb + V_LN1_G)
        slab = put(slab, lp["ln1_b"], vb + V_LN1_B)
        slab = put(slab, lp["ln2_g"], vb + V_LN2_G)
        slab = put(slab, lp["ln2_b"], vb + V_LN2_B)
        slab = put(slab, lp["bqkv"], vb + V_BQKV)
        slab = put(slab, lp["bo"], vb + V_BO)
        slab = put(slab, lp["b1"], vb + V_B1)
        slab = put(slab, lp["b2"], vb + V_B2)
    slab = put(slab, params["final_g"], OFF_FIN)
    slab = put(slab, params["final_b"], OFF_FIN + 1)
    return slab


# ------------------------------- encoder forward --------------------------------
@jax.jit
def encoder_forward(slab, token_ids, mask):
    # token_ids: (B, S) int32 ; mask: (B, S) float32 {0,1} (1 = keep)
    b, s = token_ids.shape
    ids2d = token_ids.reshape(b * s, 1).astype(jnp.int32)
    # additive key-padding bias: 0 where keep, -1e9 where masked
    bias = (mask.astype(jnp.float32) - 1.0) * 1e9                  # (B, S)

    out2d = pl.pallas_call(
        encoder_fused_kernel,
        out_shape=jax.ShapeDtypeStruct((b * s, D_MODEL), jnp.float32),
        in_specs=[_vmem(), _vmem(), _vmem()],
        out_specs=_vmem(),
    )(ids2d, bias, slab)
    return out2d.reshape(b, s, D_MODEL)


# ------------------------------------- main --------------------------------------
if __name__ == "__main__":
    key = jax.random.PRNGKey(0)
    k_param, k_tok = jax.random.split(key)

    params = init_params(k_param)
    slab = pack_params(params)   # one-time host-side packing of all parameters

    token_ids = jax.random.randint(k_tok, (BATCH, SEQ), 0, VOCAB, jnp.int32)
    # pad out the last 2 positions of the second sequence
    mask = jnp.ones((BATCH, SEQ), jnp.float32).at[1, -2:].set(0.0)

    out = encoder_forward(slab, token_ids, mask)
    jax.block_until_ready(out)
    assert out.shape == (BATCH, SEQ, D_MODEL)
    assert bool(jnp.all(jnp.isfinite(out)))
    print("KERNEL_OK")
</pallas_src>

<mosaic_0001>
module attributes {stable_mosaic.version = 11 : i64} {
  func.func @encoder_fused_kernel(%arg0: memref<16x1xi32, #tpu.memory_space<vmem>>, %arg1: memref<2x8xf32, #tpu.memory_space<vmem>>, %arg2: memref<424x128xf32, #tpu.memory_space<vmem>>, %arg3: memref<16x32xf32, #tpu.memory_space<vmem>>) attributes {dimension_semantics = [], scalar_prefetch = 0 : i64, scratch_operands = 0 : i64, tpu.core_type = #tpu.core_type<tc>} {
    %c0 = arith.constant 0 : index
    %c0_0 = arith.constant 0 : index
    %0 = vector.load %arg0[%c0, %c0_0] : memref<16x1xi32, #tpu.memory_space<vmem>>, vector<16x1xi32>
    %1 = tpu.iota {dimensions = array<i32: 1>} : vector<16x64xi32>
    %2 = vector.broadcast %0 : vector<16x1xi32> to vector<16x64xi32>
    %3 = arith.cmpi eq, %1, %2 : vector<16x64xi32>
    %4 = arith.extui %3 : vector<16x64xi1> to vector<16x64xi32>
    %5 = arith.sitofp %4 : vector<16x64xi32> to vector<16x64xf32>
    %c0_1 = arith.constant 0 : index
    %c0_2 = arith.constant 0 : index
    %6 = vector.load %arg2[%c0_1, %c0_2] : memref<424x128xf32, #tpu.memory_space<vmem>>, vector<64x32xf32>
    %cst = arith.constant dense<0.000000e+00> : vector<16x32xf32>
    %7 = tpu.matmul %5, %6, %cst {dimension_numbers = #tpu.dot_dimension_numbers<[1], [0], [0], [1], [0, 0, 1, 1], [], []>} : vector<16x64xf32>, vector<64x32xf32>, vector<16x32xf32> -> vector<16x32xf32>
    %c64 = arith.constant 64 : index
    %c0_3 = arith.constant 0 : index
    %8 = vector.load %arg2[%c64, %c0_3] : memref<424x128xf32, #tpu.memory_space<vmem>>, vector<16x32xf32>
    %9 = arith.addf %7, %8 : vector<16x32xf32>
    %c0_4 = arith.constant 0 : index
    %c0_5 = arith.constant 0 : index
    %10 = vector.load %arg1[%c0_4, %c0_5] : memref<2x8xf32, #tpu.memory_space<vmem>>, vector<2x8xf32>
    %11 = vector.shape_cast %10 : vector<2x8xf32> to vector<1x2x1x8xf32>
    %12 = vector.shape_cast %11 : vector<1x2x1x8xf32> to vector<1x2x1x8xf32>
    %13 = vector.broadcast %12 : vector<1x2x1x8xf32> to vector<4x2x8x8xf32>
    %14 = vector.shape_cast %13 : vector<4x2x8x8xf32> to vector<8x8x8xf32>
    %c240 = arith.constant 240 : index
    %c0_6 = arith.constant 0 : index
    %15 = vector.load %arg2[%c240, %c0_6] : memref<424x128xf32, #tpu.memory_space<vmem>>, vector<1x32xf32>
    %c241 = arith.constant 241 : index
    %c0_7 = arith.constant 0 : index
    %16 = vector.load %arg2[%c241, %c0_7] : memref<424x128xf32, #tpu.memory_space<vmem>>, vector<1x32xf32>
    %cst_8 = arith.constant dense<0.000000e+00> : vector<16xf32>
    %17 = vector.multi_reduction <add>, %9, %cst_8 [1] : vector<16x32xf32> to vector<16xf32>
    %18 = vector.shape_cast %17 : vector<16xf32> to vector<16x1xf32>
    %cst_9 = arith.constant 3.200000e+01 : f32
    %19 = vector.broadcast %cst_9 : f32 to vector<16x1xf32>
    %20 = arith.divf %18, %19 : vector<16x1xf32>
    %21 = vector.broadcast %20 : vector<16x1xf32> to vector<16x32xf32>
    %22 = arith.subf %9, %21 : vector<16x32xf32>
    %23 = arith.mulf %22, %22 : vector<16x32xf32>
    %cst_10 = arith.constant dense<0.000000e+00> : vector<16xf32>
    %24 = vector.multi_reduction <add>, %23, %cst_10 [1] : vector<16x32xf32> to vector<16xf32>
    %25 = vector.shape_cast %24 : vector<16xf32> to vector<16x1xf32>
    %cst_11 = arith.constant 0.0322580636 : f32
    %26 = vector.broadcast %cst_11 : f32 to vector<16x1xf32>
    %27 = arith.mulf %25, %26 : vector<16x1xf32>
    %28 = vector.broadcast %15 : vector<1x32xf32> to vector<16x32xf32>
    %29 = arith.mulf %28, %22 : vector<16x32xf32>
    %30 = math.sqrt %27 : vector<16x1xf32>
    %cst_12 = arith.constant 9.99999997E-7 : f32
    %31 = vector.broadcast %cst_12 : f32 to vector<16x1xf32>
    %32 = arith.addf %30, %31 : vector<16x1xf32>
    %33 = vector.broadcast %32 : vector<16x1xf32> to vector<16x32xf32>
    %34 = arith.divf %29, %33 : vector<16x32xf32>
    %35 = vector.broadcast %16 : vector<1x32xf32> to vector<16x32xf32>
    %36 = arith.addf %34, %35 : vector<16x32xf32>
    %c80 = arith.constant 80 : index
    %c0_13 = arith.constant 0 : index
    %37 = vector.load %arg2[%c80, %c0_13] : memref<424x128xf32, #tpu.memory_space<vmem>>, vector<32x128xf32>
    %cst_14 = arith.constant dense<0.000000e+00> : vector<16x128xf32>
    %38 = tpu.matmul %36, %37, %cst_14 {dimension_numbers = #tpu.dot_dimension_numbers<[1], [0], [0], [1], [0, 0, 1, 1], [], []>} : vector<16x32xf32>, vector<32x128xf32>, vector<16x128xf32> -> vector<16x128xf32>
    %c244 = arith.constant 244 : index
    %c0_15 = arith.constant 0 : index
    %39 = vector.load %arg2[%c244, %c0_15] : memref<424x128xf32, #tpu.memory_space<vmem>>, vector<1x128xf32>
    %40 = vector.broadcast %39 : vector<1x128xf32> to vector<16x128xf32>
    %41 = arith.addf %38, %40 : vector<16x128xf32>
    %42 = vector.extract_strided_slice %41 {offsets = [0, 0], sizes = [16, 8], strides = [1, 1]} : vector<16x128xf32> to vector<16x8xf32>
    %43 = vector.shape_cast %42 : vector<16x8xf32> to vector<2x8x8xf32>
    %44 = vector.extract_strided_slice %41 {offsets = [0, 8], sizes = [16, 8], strides = [1, 1]} : vector<16x128xf32> to vector<16x8xf32>
    %45 = vector.shape_cast %44 : vector<16x8xf32> to vector<2x8x8xf32>
    %46 = vector.extract_strided_slice %41 {offsets = [0, 16], sizes = [16, 8], strides = [1, 1]} : vector<16x128xf32> to vector<16x8xf32>
    %47 = vector.shape_cast %46 : vector<16x8xf32> to vector<2x8x8xf32>
    %48 = vector.extract_strided_slice %41 {offsets = [0, 24], sizes = [16, 8], strides = [1, 1]} : vector<16x128xf32> to vector<16x8xf32>
    %49 = vector.shape_cast %48 : vector<16x8xf32> to vector<2x8x8xf32>
    %50 = tpu.concatenate %43, %45, %47, %49 in 0 : vector<2x8x8xf32>, vector<2x8x8xf32>, vector<2x8x8xf32>, vector<2x8x8xf32> -> vector<8x8x8xf32>
    %51 = vector.extract_strided_slice %41 {offsets = [0, 32], sizes = [16, 8], strides = [1, 1]} : vector<16x128xf32> to vector<16x8xf32>
    %52 = vector.shape_cast %51 : vector<16x8xf32> to vector<2x8x8xf32>
    %53 = vector.extract_strided_slice %41 {offsets = [0, 40], sizes = [16, 8], strides = [1, 1]} : vector<16x128xf32> to vector<16x8xf32>
    %54 = vector.shape_cast %53 : vector<16x8xf32> to vector<2x8x8xf32>
    %55 = vector.extract_strided_slice %41 {offsets = [0, 48], sizes = [16, 8], strides = [1, 1]} : vector<16x128xf32> to vector<16x8xf32>
    %56 = vector.shape_cast %55 : vector<16x8xf32> to vector<2x8x8xf32>
    %57 = vector.extract_strided_slice %41 {offsets = [0, 56], sizes = [16, 8], strides = [1, 1]} : vector<16x128xf32> to vector<16x8xf32>
    %58 = vector.shape_cast %57 : vector<16x8xf32> to vector<2x8x8xf32>
    %59 = tpu.concatenate %52, %54, %56, %58 in 0 : vector<2x8x8xf32>, vector<2x8x8xf32>, vector<2x8x8xf32>, vector<2x8x8xf32> -> vector<8x8x8xf32>
    %60 = vector.extract_strided_slice %41 {offsets = [0, 64], sizes = [16, 8], strides = [1, 1]} : vector<16x128xf32> to vector<16x8xf32>
    %61 = vector.shape_cast %60 : vector<16x8xf32> to vector<2x8x8xf32>
    %62 = vector.extract_strided_slice %41 {offsets = [0, 72], sizes = [16, 8], strides = [1, 1]} : vector<16x128xf32> to vector<16x8xf32>
    %63 = vector.shape_cast %62 : vector<16x8xf32> to vector<2x8x8xf32>
    %64 = vector.extract_strided_slice %41 {offsets = [0, 80], sizes = [16, 8], strides = [1, 1]} : vector<16x128xf32> to vector<16x8xf32>
    %65 = vector.shape_cast %64 : vector<16x8xf32> to vector<2x8x8xf32>
    %66 = vector.extract_strided_slice %41 {offsets = [0, 88], sizes = [16, 8], strides = [1, 1]} : vector<16x128xf32> to vector<16x8xf32>
    %67 = vector.shape_cast %66 : vector<16x8xf32> to vector<2x8x8xf32>
    %68 = tpu.concatenate %61, %63, %65, %67 in 0 : vector<2x8x8xf32>, vector<2x8x8xf32>, vector<2x8x8xf32>, vector<2x8x8xf32> -> vector<8x8x8xf32>
    "tpu.trace_start"() <{level = 10 : i32, message = "nqd,nkd->nqk"}> : () -> ()
    %cst_16 = arith.constant dense<0.000000e+00> : vector<8x8x8xf32>
    %69 = tpu.matmul %50, %59, %cst_16 {dimension_numbers = #tpu.dot_dimension_numbers<[2], [2], [1], [1], [0, 0, 0, 1, 1, 1], [0], [0]>} : vector<8x8x8xf32>, vector<8x8x8xf32>, vector<8x8x8xf32> -> vector<8x8x8xf32>
    "tpu.trace_stop"() : () -> ()
    %cst_17 = arith.constant 0.353553385 : f32
    %70 = vector.broadcast %cst_17 : f32 to vector<8x8x8xf32>
    %71 = arith.mulf %69, %70 : vector<8x8x8xf32>
    %72 = arith.addf %71, %14 : vector<8x8x8xf32>
    %cst_18 = arith.constant dense<0xFF800000> : vector<8x8xf32>
    %73 = vector.multi_reduction <maximumf>, %72, %cst_18 [2] : vector<8x8x8xf32> to vector<8x8xf32>
    %74 = vector.shape_cast %73 : vector<8x8xf32> to vector<8x8x1xf32>
    %75 = vector.broadcast %74 : vector<8x8x1xf32> to vector<8x8x8xf32>
    %76 = arith.subf %72, %75 : vector<8x8x8xf32>
    %77 = math.exp %76 : vector<8x8x8xf32>
    %cst_19 = arith.constant dense<0.000000e+00> : vector<8x8xf32>
    %78 = vector.multi_reduction <add>, %77, %cst_19 [2] : vector<8x8x8xf32> to vector<8x8xf32>
    %79 = vector.shape_cast %78 : vector<8x8xf32> to vector<8x8x1xf32>
    %80 = vector.broadcast %79 : vector<8x8x1xf32> to vector<8x8x8xf32>
    %81 = arith.divf %77, %80 : vector<8x8x8xf32>
    "tpu.trace_start"() <{level = 10 : i32, message = "nqk,nkd->nqd"}> : () -> ()
    %cst_20 = arith.constant dense<0.000000e+00> : vector<8x8x8xf32>
    %82 = tpu.matmul %81, %68, %cst_20 {dimension_numbers = #tpu.dot_dimension_numbers<[2], [1], [1], [2], [0, 0, 0, 1, 1, 2], [0], [0]>} : vector<8x8x8xf32>, vector<8x8x8xf32>, vector<8x8x8xf32> -> vector<8x8x8xf32>
    "tpu.trace_stop"() : () -> ()
    %83 = vector.extract_strided_slice %82 {offsets = [0, 0, 0], sizes = [2, 8, 8], strides = [1, 1, 1]} : vector<8x8x8xf32> to vector<2x8x8xf32>
    %84 = vector.extract_strided_slice %82 {offsets = [2, 0, 0], sizes = [2, 8, 8], strides = [1, 1, 1]} : vector<8x8x8xf32> to vector<2x8x8xf32>
    %85 = vector.extract_strided_slice %82 {offsets = [4, 0, 0], sizes = [2, 8, 8], strides = [1, 1, 1]} : vector<8x8x8xf32> to vector<2x8x8xf32>
    %86 = vector.extract_strided_slice %82 {offsets = [6, 0, 0], sizes = [2, 8, 8], strides = [1, 1, 1]} : vector<8x8x8xf32> to vector<2x8x8xf32>
    %87 = tpu.concatenate %83, %84, %85, %86 in 2 : vector<2x8x8xf32>, vector<2x8x8xf32>, vector<2x8x8xf32>, vector<2x8x8xf32> -> vector<2x8x32xf32>
    %88 = vector.shape_cast %87 : vector<2x8x32xf32> to vector<16x32xf32>
    %c112 = arith.constant 112 : index
    %c0_21 = arith.constant 0 : index
    %89 = vector.load %arg2[%c112, %c0_21] : memref<424x128xf32, #tpu.memory_space<vmem>>, vector<32x32xf32>
    %cst_22 = arith.constant dense<0.000000e+00> : vector<16x32xf32>
    %90 = tpu.matmul %88, %89, %cst_22 {dimension_numbers = #tpu.dot_dimension_numbers<[1], [0], [0], [1], [0, 0, 1, 1], [], []>} : vector<16x32xf32>, vector<32x32xf32>, vector<16x32xf32> -> vector<16x32xf32>
    %91 = arith.addf %9, %90 : vector<16x32xf32>
    %c245 = arith.constant 245 : index
    %c0_23 = arith.constant 0 : index
    %92 = vector.load %arg2[%c245, %c0_23] : memref<424x128xf32, #tpu.memory_space<vmem>>, vector<1x32xf32>
    %93 = vector.broadcast %92 : vector<1x32xf32> to vector<16x32xf32>
    %94 = arith.addf %91, %93 : vector<16x32xf32>
    %c242 = arith.constant 242 : index
    %c0_24 = arith.constant 0 : index
    %95 = vector.load %arg2[%c242, %c0_24] : memref<424x128xf32, #tpu.memory_space<vmem>>, vector<1x32xf32>
    %c243 = arith.constant 243 : index
    %c0_25 = arith.constant 0 : index
    %96 = vector.load %arg2[%c243, %c0_25] : memref<424x128xf32, #tpu.memory_space<vmem>>, vector<1x32xf32>
    %cst_26 = arith.constant dense<0.000000e+00> : vector<16xf32>
    %97 = vector.multi_reduction <add>, %94, %cst_26 [1] : vector<16x32xf32> to vector<16xf32>
    %98 = vector.shape_cast %97 : vector<16xf32> to vector<16x1xf32>
    %cst_27 = arith.constant 3.200000e+01 : f32
    %99 = vector.broadcast %cst_27 : f32 to vector<16x1xf32>
    %100 = arith.divf %98, %99 : vector<16x1xf32>
    %101 = vector.broadcast %100 : vector<16x1xf32> to vector<16x32xf32>
    %102 = arith.subf %94, %101 : vector<16x32xf32>
    %103 = arith.mulf %102, %102 : vector<16x32xf32>
    %cst_28 = arith.constant dense<0.000000e+00> : vector<16xf32>
    %104 = vector.multi_reduction <add>, %103, %cst_28 [1] : vector<16x32xf32> to vector<16xf32>
    %105 = vector.shape_cast %104 : vector<16xf32> to vector<16x1xf32>
    %cst_29 = arith.constant 0.0322580636 : f32
    %106 = vector.broadcast %cst_29 : f32 to vector<16x1xf32>
    %107 = arith.mulf %105, %106 : vector<16x1xf32>
    %108 = vector.broadcast %95 : vector<1x32xf32> to vector<16x32xf32>
    %109 = arith.mulf %108, %102 : vector<16x32xf32>
    %110 = math.sqrt %107 : vector<16x1xf32>
    %cst_30 = arith.constant 9.99999997E-7 : f32
    %111 = vector.broadcast %cst_30 : f32 to vector<16x1xf32>
    %112 = arith.addf %110, %111 : vector<16x1xf32>
    %113 = vector.broadcast %112 : vector<16x1xf32> to vector<16x32xf32>
    %114 = arith.divf %109, %113 : vector<16x32xf32>
    %115 = vector.broadcast %96 : vector<1x32xf32> to vector<16x32xf32>
    %116 = arith.addf %114, %115 : vector<16x32xf32>
    %c144 = arith.constant 144 : index
    %c0_31 = arith.constant 0 : index
    %117 = vector.load %arg2[%c144, %c0_31] : memref<424x128xf32, #tpu.memory_space<vmem>>, vector<32x64xf32>
    %cst_32 = arith.constant dense<0.000000e+00> : vector<16x64xf32>
    %118 = tpu.matmul %116, %117, %cst_32 {dimension_numbers = #tpu.dot_dimension_numbers<[1], [0], [0], [1], [0, 0, 1, 1], [], []>} : vector<16x32xf32>, vector<32x64xf32>, vector<16x64xf32> -> vector<16x64xf32>
    %c246 = arith.constant 246 : index
    %c0_33 = arith.constant 0 : index
    %119 = vector.load %arg2[%c246, %c0_33] : memref<424x128xf32, #tpu.memory_space<vmem>>, vector<1x64xf32>
    %120 = vector.broadcast %119 : vector<1x64xf32> to vector<16x64xf32>
    %121 = arith.addf %118, %120 : vector<16x64xf32>
    %cst_34 = arith.constant 0.000000e+00 : f32
    %122 = vector.broadcast %cst_34 : f32 to vector<16x64xf32>
    %123 = arith.maximumf %121, %122 : vector<16x64xf32>
    %c176 = arith.constant 176 : index
    %c0_35 = arith.constant 0 : index
    %124 = vector.load %arg2[%c176, %c0_35] : memref<424x128xf32, #tpu.memory_space<vmem>>, vector<64x32xf32>
    %cst_36 = arith.constant dense<0.000000e+00> : vector<16x32xf32>
    %125 = tpu.matmul %123, %124, %cst_36 {dimension_numbers = #tpu.dot_dimension_numbers<[1], [0], [0], [1], [0, 0, 1, 1], [], []>} : vector<16x64xf32>, vector<64x32xf32>, vector<16x32xf32> -> vector<16x32xf32>
    %126 = arith.addf %94, %125 : vector<16x32xf32>
    %c247 = arith.constant 247 : index
    %c0_37 = arith.constant 0 : index
    %127 = vector.load %arg2[%c247, %c0_37] : memref<424x128xf32, #tpu.memory_space<vmem>>, vector<1x32xf32>
    %128 = vector.broadcast %127 : vector<1x32xf32> to vector<16x32xf32>
    %129 = arith.addf %126, %128 : vector<16x32xf32>
    %c408 = arith.constant 408 : index
    %c0_38 = arith.constant 0 : index
    %130 = vector.load %arg2[%c408, %c0_38] : memref<424x128xf32, #tpu.memory_space<vmem>>, vector<1x32xf32>
    %c409 = arith.constant 409 : index
    %c0_39 = arith.constant 0 : index
    %131 = vector.load %arg2[%c409, %c0_39] : memref<424x128xf32, #tpu.memory_space<vmem>>, vector<1x32xf32>
    %cst_40 = arith.constant dense<0.000000e+00> : vector<16xf32>
    %132 = vector.multi_reduction <add>, %129, %cst_40 [1] : vector<16x32xf32> to vector<16xf32>
    %133 = vector.shape_cast %132 : vector<16xf32> to vector<16x1xf32>
    %cst_41 = arith.constant 3.200000e+01 : f32
    %134 = vector.broadcast %cst_41 : f32 to vector<16x1xf32>
    %135 = arith.divf %133, %134 : vector<16x1xf32>
    %136 = vector.broadcast %135 : vector<16x1xf32> to vector<16x32xf32>
    %137 = arith.subf %129, %136 : vector<16x32xf32>
    %138 = arith.mulf %137, %137 : vector<16x32xf32>
    %cst_42 = arith.constant dense<0.000000e+00> : vector<16xf32>
    %139 = vector.multi_reduction <add>, %138, %cst_42 [1] : vector<16x32xf32> to vector<16xf32>
    %140 = vector.shape_cast %139 : vector<16xf32> to vector<16x1xf32>
    %cst_43 = arith.constant 0.0322580636 : f32
    %141 = vector.broadcast %cst_43 : f32 to vector<16x1xf32>
    %142 = arith.mulf %140, %141 : vector<16x1xf32>
    %143 = vector.broadcast %130 : vector<1x32xf32> to vector<16x32xf32>
    %144 = arith.mulf %143, %137 : vector<16x32xf32>
    %145 = math.sqrt %142 : vector<16x1xf32>
    %cst_44 = arith.constant 9.99999997E-7 : f32
    %146 = vector.broadcast %cst_44 : f32 to vector<16x1xf32>
    %147 = arith.addf %145, %146 : vector<16x1xf32>
    %148 = vector.broadcast %147 : vector<16x1xf32> to vector<16x32xf32>
    %149 = arith.divf %144, %148 : vector<16x32xf32>
    %150 = vector.broadcast %131 : vector<1x32xf32> to vector<16x32xf32>
    %151 = arith.addf %149, %150 : vector<16x32xf32>
    %c248 = arith.constant 248 : index
    %c0_45 = arith.constant 0 : index
    %152 = vector.load %arg2[%c248, %c0_45] : memref<424x128xf32, #tpu.memory_space<vmem>>, vector<32x128xf32>
    %cst_46 = arith.constant dense<0.000000e+00> : vector<16x128xf32>
    %153 = tpu.matmul %151, %152, %cst_46 {dimension_numbers = #tpu.dot_dimension_numbers<[1], [0], [0], [1], [0, 0, 1, 1], [], []>} : vector<16x32xf32>, vector<32x128xf32>, vector<16x128xf32> -> vector<16x128xf32>
    %c412 = arith.constant 412 : index
    %c0_47 = arith.constant 0 : index
    %154 = vector.load %arg2[%c412, %c0_47] : memref<424x128xf32, #tpu.memory_space<vmem>>, vector<1x128xf32>
    %155 = vector.broadcast %154 : vector<1x128xf32> to vector<16x128xf32>
    %156 = arith.addf %153, %155 : vector<16x128xf32>
    %157 = vector.extract_strided_slice %156 {offsets = [0, 0], sizes = [16, 8], strides = [1, 1]} : vector<16x128xf32> to vector<16x8xf32>
    %158 = vector.shape_cast %157 : vector<16x8xf32> to vector<2x8x8xf32>
    %159 = vector.extract_strided_slice %156 {offsets = [0, 8], sizes = [16, 8], strides = [1, 1]} : vector<16x128xf32> to vector<16x8xf32>
    %160 = vector.shape_cast %159 : vector<16x8xf32> to vector<2x8x8xf32>
    %161 = vector.extract_strided_slice %156 {offsets = [0, 16], sizes = [16, 8], strides = [1, 1]} : vector<16x128xf32> to vector<16x8xf32>
    %162 = vector.shape_cast %161 : vector<16x8xf32> to vector<2x8x8xf32>
    %163 = vector.extract_strided_slice %156 {offsets = [0, 24], sizes = [16, 8], strides = [1, 1]} : vector<16x128xf32> to vector<16x8xf32>
    %164 = vector.shape_cast %163 : vector<16x8xf32> to vector<2x8x8xf32>
    %165 = tpu.concatenate %158, %160, %162, %164 in 0 : vector<2x8x8xf32>, vector<2x8x8xf32>, vector<2x8x8xf32>, vector<2x8x8xf32> -> vector<8x8x8xf32>
    %166 = vector.extract_strided_slice %156 {offsets = [0, 32], sizes = [16, 8], strides = [1, 1]} : vector<16x128xf32> to vector<16x8xf32>
    %167 = vector.shape_cast %166 : vector<16x8xf32> to vector<2x8x8xf32>
    %168 = vector.extract_strided_slice %156 {offsets = [0, 40], sizes = [16, 8], strides = [1, 1]} : vector<16x128xf32> to vector<16x8xf32>
    %169 = vector.shape_cast %168 : vector<16x8xf32> to vector<2x8x8xf32>
    %170 = vector.extract_strided_slice %156 {offsets = [0, 48], sizes = [16, 8], strides = [1, 1]} : vector<16x128xf32> to vector<16x8xf32>
    %171 = vector.shape_cast %170 : vector<16x8xf32> to vector<2x8x8xf32>
    %172 = vector.extract_strided_slice %156 {offsets = [0, 56], sizes = [16, 8], strides = [1, 1]} : vector<16x128xf32> to vector<16x8xf32>
    %173 = vector.shape_cast %172 : vector<16x8xf32> to vector<2x8x8xf32>
    %174 = tpu.concatenate %167, %169, %171, %173 in 0 : vector<2x8x8xf32>, vector<2x8x8xf32>, vector<2x8x8xf32>, vector<2x8x8xf32> -> vector<8x8x8xf32>
    %175 = vector.extract_strided_slice %156 {offsets = [0, 64], sizes = [16, 8], strides = [1, 1]} : vector<16x128xf32> to vector<16x8xf32>
    %176 = vector.shape_cast %175 : vector<16x8xf32> to vector<2x8x8xf32>
    %177 = vector.extract_strided_slice %156 {offsets = [0, 72], sizes = [16, 8], strides = [1, 1]} : vector<16x128xf32> to vector<16x8xf32>
    %178 = vector.shape_cast %177 : vector<16x8xf32> to vector<2x8x8xf32>
    %179 = vector.extract_strided_slice %156 {offsets = [0, 80], sizes = [16, 8], strides = [1, 1]} : vector<16x128xf32> to vector<16x8xf32>
    %180 = vector.shape_cast %179 : vector<16x8xf32> to vector<2x8x8xf32>
    %181 = vector.extract_strided_slice %156 {offsets = [0, 88], sizes = [16, 8], strides = [1, 1]} : vector<16x128xf32> to vector<16x8xf32>
    %182 = vector.shape_cast %181 : vector<16x8xf32> to vector<2x8x8xf32>
    %183 = tpu.concatenate %176, %178, %180, %182 in 0 : vector<2x8x8xf32>, vector<2x8x8xf32>, vector<2x8x8xf32>, vector<2x8x8xf32> -> vector<8x8x8xf32>
    "tpu.trace_start"() <{level = 10 : i32, message = "nqd,nkd->nqk"}> : () -> ()
    %cst_48 = arith.constant dense<0.000000e+00> : vector<8x8x8xf32>
    %184 = tpu.matmul %165, %174, %cst_48 {dimension_numbers = #tpu.dot_dimension_numbers<[2], [2], [1], [1], [0, 0, 0, 1, 1, 1], [0], [0]>} : vector<8x8x8xf32>, vector<8x8x8xf32>, vector<8x8x8xf32> -> vector<8x8x8xf32>
    "tpu.trace_stop"() : () -> ()
    %cst_49 = arith.constant 0.353553385 : f32
    %185 = vector.broadcast %cst_49 : f32 to vector<8x8x8xf32>
    %186 = arith.mulf %184, %185 : vector<8x8x8xf32>
    %187 = arith.addf %186, %14 : vector<8x8x8xf32>
    %cst_50 = arith.constant dense<0xFF800000> : vector<8x8xf32>
    %188 = vector.multi_reduction <maximumf>, %187, %cst_50 [2] : vector<8x8x8xf32> to vector<8x8xf32>
    %189 = vector.shape_cast %188 : vector<8x8xf32> to vector<8x8x1xf32>
    %190 = vector.broadcast %189 : vector<8x8x1xf32> to vector<8x8x8xf32>
    %191 = arith.subf %187, %190 : vector<8x8x8xf32>
    %192 = math.exp %191 : vector<8x8x8xf32>
    %cst_51 = arith.constant dense<0.000000e+00> : vector<8x8xf32>
    %193 = vector.multi_reduction <add>, %192, %cst_51 [2] : vector<8x8x8xf32> to vector<8x8xf32>
    %194 = vector.shape_cast %193 : vector<8x8xf32> to vector<8x8x1xf32>
    %195 = vector.broadcast %194 : vector<8x8x1xf32> to vector<8x8x8xf32>
    %196 = arith.divf %192, %195 : vector<8x8x8xf32>
    "tpu.trace_start"() <{level = 10 : i32, message = "nqk,nkd->nqd"}> : () -> ()
    %cst_52 = arith.constant dense<0.000000e+00> : vector<8x8x8xf32>
    %197 = tpu.matmul %196, %183, %cst_52 {dimension_numbers = #tpu.dot_dimension_numbers<[2], [1], [1], [2], [0, 0, 0, 1, 1, 2], [0], [0]>} : vector<8x8x8xf32>, vector<8x8x8xf32>, vector<8x8x8xf32> -> vector<8x8x8xf32>
    "tpu.trace_stop"() : () -> ()
    %198 = vector.extract_strided_slice %197 {offsets = [0, 0, 0], sizes = [2, 8, 8], strides = [1, 1, 1]} : vector<8x8x8xf32> to vector<2x8x8xf32>
    %199 = vector.extract_strided_slice %197 {offsets = [2, 0, 0], sizes = [2, 8, 8], strides = [1, 1, 1]} : vector<8x8x8xf32> to vector<2x8x8xf32>
    %200 = vector.extract_strided_slice %197 {offsets = [4, 0, 0], sizes = [2, 8, 8], strides = [1, 1, 1]} : vector<8x8x8xf32> to vector<2x8x8xf32>
    %201 = vector.extract_strided_slice %197 {offsets = [6, 0, 0], sizes = [2, 8, 8], strides = [1, 1, 1]} : vector<8x8x8xf32> to vector<2x8x8xf32>
    %202 = tpu.concatenate %198, %199, %200, %201 in 2 : vector<2x8x8xf32>, vector<2x8x8xf32>, vector<2x8x8xf32>, vector<2x8x8xf32> -> vector<2x8x32xf32>
    %203 = vector.shape_cast %202 : vector<2x8x32xf32> to vector<16x32xf32>
    %c280 = arith.constant 280 : index
    %c0_53 = arith.constant 0 : index
    %204 = vector.load %arg2[%c280, %c0_53] : memref<424x128xf32, #tpu.memory_space<vmem>>, vector<32x32xf32>
    %cst_54 = arith.constant dense<0.000000e+00> : vector<16x32xf32>
    %205 = tpu.matmul %203, %204, %cst_54 {dimension_numbers = #tpu.dot_dimension_numbers<[1], [0], [0], [1], [0, 0, 1, 1], [], []>} : vector<16x32xf32>, vector<32x32xf32>, vector<16x32xf32> -> vector<16x32xf32>
    %206 = arith.addf %129, %205 : vector<16x32xf32>
    %c413 = arith.constant 413 : index
    %c0_55 = arith.constant 0 : index
    %207 = vector.load %arg2[%c413, %c0_55] : memref<424x128xf32, #tpu.memory_space<vmem>>, vector<1x32xf32>
    %208 = vector.broadcast %207 : vector<1x32xf32> to vector<16x32xf32>
    %209 = arith.addf %206, %208 : vector<16x32xf32>
    %c410 = arith.constant 410 : index
    %c0_56 = arith.constant 0 : index
    %210 = vector.load %arg2[%c410, %c0_56] : memref<424x128xf32, #tpu.memory_space<vmem>>, vector<1x32xf32>
    %c411 = arith.constant 411 : index
    %c0_57 = arith.constant 0 : index
    %211 = vector.load %arg2[%c411, %c0_57] : memref<424x128xf32, #tpu.memory_space<vmem>>, vector<1x32xf32>
    %cst_58 = arith.constant dense<0.000000e+00> : vector<16xf32>
    %212 = vector.multi_reduction <add>, %209, %cst_58 [1] : vector<16x32xf32> to vector<16xf32>
    %213 = vector.shape_cast %212 : vector<16xf32> to vector<16x1xf32>
    %cst_59 = arith.constant 3.200000e+01 : f32
    %214 = vector.broadcast %cst_59 : f32 to vector<16x1xf32>
    %215 = arith.divf %213, %214 : vector<16x1xf32>
    %216 = vector.broadcast %215 : vector<16x1xf32> to vector<16x32xf32>
    %217 = arith.subf %209, %216 : vector<16x32xf32>
    %218 = arith.mulf %217, %217 : vector<16x32xf32>
    %cst_60 = arith.constant dense<0.000000e+00> : vector<16xf32>
    %219 = vector.multi_reduction <add>, %218, %cst_60 [1] : vector<16x32xf32> to vector<16xf32>
    %220 = vector.shape_cast %219 : vector<16xf32> to vector<16x1xf32>
    %cst_61 = arith.constant 0.0322580636 : f32
    %221 = vector.broadcast %cst_61 : f32 to vector<16x1xf32>
    %222 = arith.mulf %220, %221 : vector<16x1xf32>
    %223 = vector.broadcast %210 : vector<1x32xf32> to vector<16x32xf32>
    %224 = arith.mulf %223, %217 : vector<16x32xf32>
    %225 = math.sqrt %222 : vector<16x1xf32>
    %cst_62 = arith.constant 9.99999997E-7 : f32
    %226 = vector.broadcast %cst_62 : f32 to vector<16x1xf32>
    %227 = arith.addf %225, %226 : vector<16x1xf32>
    %228 = vector.broadcast %227 : vector<16x1xf32> to vector<16x32xf32>
    %229 = arith.divf %224, %228 : vector<16x32xf32>
    %230 = vector.broadcast %211 : vector<1x32xf32> to vector<16x32xf32>
    %231 = arith.addf %229, %230 : vector<16x32xf32>
    %c312 = arith.constant 312 : index
    %c0_63 = arith.constant 0 : index
    %232 = vector.load %arg2[%c312, %c0_63] : memref<424x128xf32, #tpu.memory_space<vmem>>, vector<32x64xf32>
    %cst_64 = arith.constant dense<0.000000e+00> : vector<16x64xf32>
    %233 = tpu.matmul %231, %232, %cst_64 {dimension_numbers = #tpu.dot_dimension_numbers<[1], [0], [0], [1], [0, 0, 1, 1], [], []>} : vector<16x32xf32>, vector<32x64xf32>, vector<16x64xf32> -> vector<16x64xf32>
    %c414 = arith.constant 414 : index
    %c0_65 = arith.constant 0 : index
    %234 = vector.load %arg2[%c414, %c0_65] : memref<424x128xf32, #tpu.memory_space<vmem>>, vector<1x64xf32>
    %235 = vector.broadcast %234 : vector<1x64xf32> to vector<16x64xf32>
    %236 = arith.addf %233, %235 : vector<16x64xf32>
    %cst_66 = arith.constant 0.000000e+00 : f32
    %237 = vector.broadcast %cst_66 : f32 to vector<16x64xf32>
    %238 = arith.maximumf %236, %237 : vector<16x64xf32>
    %c344 = arith.constant 344 : index
    %c0_67 = arith.constant 0 : index
    %239 = vector.load %arg2[%c344, %c0_67] : memref<424x128xf32, #tpu.memory_space<vmem>>, vector<64x32xf32>
    %cst_68 = arith.constant dense<0.000000e+00> : vector<16x32xf32>
    %240 = tpu.matmul %238, %239, %cst_68 {dimension_numbers = #tpu.dot_dimension_numbers<[1], [0], [0], [1], [0, 0, 1, 1], [], []>} : vector<16x64xf32>, vector<64x32xf32>, vector<16x32xf32> -> vector<16x32xf32>
    %241 = arith.addf %209, %240 : vector<16x32xf32>
    %c415 = arith.constant 415 : index
    %c0_69 = arith.constant 0 : index
    %242 = vector.load %arg2[%c415, %c0_69] : memref<424x128xf32, #tpu.memory_space<vmem>>, vector<1x32xf32>
    %243 = vector.broadcast %242 : vector<1x32xf32> to vector<16x32xf32>
    %244 = arith.addf %241, %243 : vector<16x32xf32>
    %c416 = arith.constant 416 : index
    %c0_70 = arith.constant 0 : index
    %245 = vector.load %arg2[%c416, %c0_70] : memref<424x128xf32, #tpu.memory_space<vmem>>, vector<1x32xf32>
    %c417 = arith.constant 417 : index
    %c0_71 = arith.constant 0 : index
    %246 = vector.load %arg2[%c417, %c0_71] : memref<424x128xf32, #tpu.memory_space<vmem>>, vector<1x32xf32>
    %cst_72 = arith.constant dense<0.000000e+00> : vector<16xf32>
    %247 = vector.multi_reduction <add>, %244, %cst_72 [1] : vector<16x32xf32> to vector<16xf32>
    %248 = vector.shape_cast %247 : vector<16xf32> to vector<16x1xf32>
    %cst_73 = arith.constant 3.200000e+01 : f32
    %249 = vector.broadcast %cst_73 : f32 to vector<16x1xf32>
    %250 = arith.divf %248, %249 : vector<16x1xf32>
    %251 = vector.broadcast %250 : vector<16x1xf32> to vector<16x32xf32>
    %252 = arith.subf %244, %251 : vector<16x32xf32>
    %253 = arith.mulf %252, %252 : vector<16x32xf32>
    %cst_74 = arith.constant dense<0.000000e+00> : vector<16xf32>
    %254 = vector.multi_reduction <add>, %253, %cst_74 [1] : vector<16x32xf32> to vector<16xf32>
    %255 = vector.shape_cast %254 : vector<16xf32> to vector<16x1xf32>
    %cst_75 = arith.constant 3.200000e+01 : f32
    %256 = vector.broadcast %cst_75 : f32 to vector<16x1xf32>
    %257 = arith.divf %255, %256 : vector<16x1xf32>
    %cst_76 = arith.constant 9.99999974E-6 : f32
    %258 = vector.broadcast %cst_76 : f32 to vector<16x1xf32>
    %259 = arith.addf %257, %258 : vector<16x1xf32>
    %260 = math.rsqrt %259 : vector<16x1xf32>
    %261 = vector.broadcast %260 : vector<16x1xf32> to vector<16x32xf32>
    %262 = arith.mulf %252, %261 : vector<16x32xf32>
    %263 = vector.broadcast %245 : vector<1x32xf32> to vector<16x32xf32>
    %264 = arith.mulf %262, %263 : vector<16x32xf32>
    %265 = vector.broadcast %246 : vector<1x32xf32> to vector<16x32xf32>
    %266 = arith.addf %264, %265 : vector<16x32xf32>
    %c0_77 = arith.constant 0 : index
    %c0_78 = arith.constant 0 : index
    %267 = vector.load %arg3[%c0_77, %c0_78] : memref<16x32xf32, #tpu.memory_space<vmem>>, vector<16x32xf32>
    tpu.vector_store %arg3[%c0_77, %c0_78], %266 {strides = array<i32>} : memref<16x32xf32, #tpu.memory_space<vmem>>, vector<16x32xf32>,
    return
  }
}

</mosaic_0001>

<llo_original>
// kernel: encoder_forward.1
$region0: #{encoder_forward.1}
  #allocation0 [shape = 'u32[]', space=smem, size = 0x4, offset = 0x4, fixed_abs, tag = 'smem constant byte address 0x4 - core index']
  #allocation1 [shape = 'u32[72,128]{1,0:T(1,128)}', space=vmem, size = 0x9000, scoped, tag = 'internal scratch']
  %s0 = inlined_call_operand.vmem [shape: s32[16,1], index: 0, kind: input, shape index: {}]
  %s1 = inlined_call_operand.vmem [shape: f32[2,8], index: 1, kind: input, shape index: {}]
  %s2 = inlined_call_operand.hbm [shape: f32[424,128], index: 2, kind: input, shape index: {}]
  %s3 = inlined_call_operand.hbm [shape: f32[16,32], index: 3, kind: output, shape index: {}]
  %s4 = sld [smem:[#allocation0]]
  $region26: #{encoder_forward.1} parent=0
    _
  %s6 = ssub.s32 1, %s4
  %s7 = scalar_select 0, %s6, %s4
  $region1: #{encoder_forward.1} parent=0
    #allocation2 [shape = 'u8[217088]{0}', space=vmem, size = 0x35000, scoped, tag = 'input window, operand 2, single buffered']
    #allocation3 [shape = 's32[1]{0}', space=sflag, size = 0x4, scoped, tag = 'scoped memory for encoder_forward.1']
    #allocation4 [shape = 's32[1]{0}', space=sflag, size = 0x4, scoped, tag = 'scoped memory for encoder_forward.1']
    #allocation5 [shape = 'u8[8192]{0}', space=vmem, size = 0x2000, scoped, tag = 'output window, operand 0, single buffered']
    %8 = vsyncpa [#allocation3], 0
    %9 = vsyncpa [#allocation4], 0
    // Predicated region
    $region2: #{encoder_forward.1} parent=1 // pred_check
      _
    $region3: #{encoder_forward.1} parent=1 // pred_check_branch
      %11 = sbr.rel (0) target = $region5
    $region4: #{encoder_forward.1} parent=1 // pred_region
      _
    $region5: #{encoder_forward.1} parent=1 // pred_fallthru
      _
    // Predicated region
    $region6: #{encoder_forward.1} parent=1 // pred_check
      _
    $region7: #{encoder_forward.1} parent=1 // pred_check_branch
      %13 = sbr.rel (0) target = $region9
    $region8: #{encoder_forward.1} parent=1 // pred_region
      _
    $region9: #{encoder_forward.1} parent=1 // pred_fallthru
      _
    // Predicated region
    $region10: #{encoder_forward.1} parent=1 // pred_check
      _
    $region11: #{encoder_forward.1} parent=1 // pred_check_branch
      %15 = sbr.rel (0) target = $region13
    $region12: #{encoder_forward.1} parent=1 // pred_region
      %17 = vsyncadd [#allocation3], 0
      %s18 = sshll.u32 %s2, 4
      %s19 = int_to_ptr.hbm [resolvable:$true] %s18
      %s20 = sshll.u32 [#allocation2], 4
      %s21 = int_to_ptr.vmem [resolvable:$true] %s20
      %26 = dma.hbm_to_vmem [thread:$0]  %s19, 6784, %s21, [#allocation3], 128, 128, 8
    $region13: #{encoder_forward.1} parent=1 // pred_fallthru
      _
    // Predicated region
    $region14: #{encoder_forward.1} parent=1 // pred_check
      _
    $region15: #{encoder_forward.1} parent=1 // pred_check_branch
      %28 = sbr.rel (0) target = $region17
    $region16: #{encoder_forward.1} parent=1 // pred_region
      %30 = dma.done [#allocation3], 6784
    $region17: #{encoder_forward.1} parent=1 // pred_fallthru
      _
    %v31 = vld [vmem:[%s0] sm:$0xff]
    %v32 = vld [vmem:[%s0 + $0x8] sm:$0xff]
    %v33 = vlaneseq
    %v34 = vand.u32 %v33, 127
    %35 = vset.pattern.permute.xlu0 0
    %36 = vperm.xlu0 %35, %v31
    %v37 = vpop.permute.xlu0 %36
    %38 = vset.pattern.permute.xlu0 0
    %39 = vperm.xlu0 %38, %v32
    %v40 = vpop.permute.xlu0 %39
    %vm41 = vcmp.eq.s32.totalorder %v34, %v37
    %vm42 = vcmp.eq.s32.totalorder %v34, %v40
    %v43 = vsel %vm41, 1, 0
    %v44 = vsel %vm42, 1, 0
    %v45 = vcvt.s32.f32 %v43
    %v46 = vcvt.s32.f32 %v44
    %v47 = vld [vmem:[#allocation2] sm:$0xff]
    %v48 = vld [vmem:[#allocation2 + $0x8] sm:$0xff]
    %v49 = vld [vmem:[#allocation2 + $0x10] sm:$0xff]
    %v50 = vld [vmem:[#allocation2 + $0x18] sm:$0xff]
    %v51 = vld [vmem:[#allocation2 + $0x20] sm:$0xff]
    %v52 = vld [vmem:[#allocation2 + $0x28] sm:$0xff]
    %v53 = vld [vmem:[#allocation2 + $0x30] sm:$0xff]
    %v54 = vld [vmem:[#allocation2 + $0x38] sm:$0xff]
    %v55 = vld [vmem:[#allocation2 + $0x40] sm:$0xff]
    %v56 = vld [vmem:[#allocation2 + $0x48] sm:$0xff]
    %vm57 = vcmask 523264
    %v59 = vsel %vm57, %v45, 0
    %v62 = vsel %vm57, %v46, 0
    %64 = vmatpush.msra.mxu0 0.0
    %65 = vmatpush.msra.mxu0 0.0
    %66 = vmatpush.msra.mxu0 0.0
    %67 = vmatpush.msra.mxu0 0.0
    %68 = vmatpush.msra.mxu0 0.0
    %69 = vmatpush.msra.mxu0 0.0
    %70 = vmatpush.msra.mxu0 0.0
    %71 = vmatpush.msra.mxu0 0.0
    %72 = vmatpush.msra.mxu0 %v54
    %73 = vmatpush.msra.mxu0 %v53
    %74 = vmatpush.msra.mxu0 %v52
    %75 = vmatpush.msra.mxu0 %v51
    %76 = vmatpush.msra.mxu0 %v50
    %77 = vmatpush.msra.mxu0 %v49
    %78 = vmatpush.msra.mxu0 %v48
    %79 = vmatpush.msra.mxu0 %v47
    %80 = vmatmul.f32.gmra.mxu0 %v59
    %v81 = vpop.f32.mrf.mxu0
    %v82 = vadd.f32 %v55, %v81
    %83 = vmatmul.f32.gmra.mxu0 %v62
    %v84 = vpop.f32.mrf.mxu0
    %v85 = vadd.f32 %v56, %v84
    %86 = vdwg.mxu0
    %v87 = vld [vmem:[%s1] sm:$0x3]
    %v89 = vrot.slane %v87, 1
    %v90 = vperm.slane %v87, 0
    %v91 = vperm.slane %v89, 0
    %v94 = vld [vmem:[#allocation2 + $0xf0] sm:$0x1]
    %v95 = vld [vmem:[#allocation2 + $0xf1] sm:$0x1]
    %vm96 = vcmask 261120
    %v97 = vsel %vm96, %v82, 0.0
    %98 = vadd.xlane.f32.xlu0 %v97
    %v99 = vpop.xlane.xlu0 %98
    %v100 = vsel %vm96, %v85, 0.0
    %101 = vadd.xlane.f32.xlu0 %v100
    %v102 = vpop.xlane.xlu0 %101
    %v103 = vrcp.pop 32.0
    %v104 = vmul.f32 32.0, %v103
    %v105 = vsub.f32 1.0, %v104
    %v106 = vmul.f32 %v103, %v105
    %v107 = vadd.f32 %v103, %v106
    %vm108 = vweird.f32 %v103
    %v109 = vsel %vm108, %v103, %v107
    %v110 = vmul.f32 %v99, %v109
    %v111 = vmul.f32 %v102, %v109
    %v112 = vsub.f32 %v82, %v110
    %v113 = vsub.f32 %v85, %v111
    %v114 = vmul.f32 %v112, %v112
    %v115 = vmul.f32 %v113, %v113
    %v116 = vsel %vm96, %v114, 0.0
    %117 = vadd.xlane.f32.xlu0 %v116
    %v118 = vpop.xlane.xlu0 %117
    %v119 = vsel %vm96, %v115, 0.0
    %120 = vadd.xlane.f32.xlu0 %v119
    %v121 = vpop.xlane.xlu0 %120
    %v122 = vmul.f32 %v118, 0.032258064
    %v123 = vmul.f32 %v121, 0.032258064
    %v124 = vperm.slane %v94, 0
    %v125 = vmul.f32 %v124, %v112
    %v126 = vmul.f32 %v124, %v113
    %v127 = vrsqrt.pop %v122
    %v128 = vmul.f32 %v127, %v122
    %v129 = vmul.f32 %v128, %v127
    %v130 = vmul.f32 0.5, %v129
    %v131 = vsub.f32 1.5, %v130
    %v132 = vmul.f32 %v127, %v131
    %v133 = vmul.f32 %v122, %v132
    %vm134 = vcmp.eq.f32.partialorder %v122, inf
    %v135 = vsel %vm134, %v122, %v133
    %vm136 = vcmp.eq.f32.partialorder %v122, 0.0
    %v137 = vand.u32 %v122, 2147483648
    %v138 = vsel %vm136, %v137, %v135
    %v139 = vrsqrt.pop %v123
    %v140 = vmul.f32 %v139, %v123
    %v141 = vmul.f32 %v140, %v139
    %v142 = vmul.f32 0.5, %v141
    %v143 = vsub.f32 1.5, %v142
    %v144 = vmul.f32 %v139, %v143
    %v145 = vmul.f32 %v123, %v144
    %vm146 = vcmp.eq.f32.partialorder %v123, inf
    %v147 = vsel %vm146, %v123, %v145
    %vm148 = vcmp.eq.f32.partialorder %v123, 0.0
    %v149 = vand.u32 %v123, 2147483648
    %v150 = vsel %vm148, %v149, %v147
    %v151 = vadd.f32 %v138, 1e-06
    %v152 = vadd.f32 %v150, 1e-06
    %v153 = vrcp.pop %v151
    %v154 = vmul.f32 %v151, %v153
    %v155 = vsub.f32 1.0, %v154
    %v156 = vmul.f32 %v153, %v155
    %v157 = vadd.f32 %v153, %v156
    %vm158 = vweird.f32 %v151
    %vm159 = vweird.f32 %v153
    %vm160 = vmor %vm158, %vm159
    %v161 = vsel %vm160, %v153, %v157
    %v162 = vand.u32 2147483647, %v151
    %vm163 = vcmp.eq.f32.partialorder %v162, 8.507059e+37
    %v164 = vand.u32 %v151, 2147483648
    %v165 = vor.u32 1.1754944e-38, %v164
    %v166 = vsel %vm163, %v165, %v161
    %v167 = vmul.f32 %v125, %v166
    %v168 = vrcp.pop %v152
    %v169 = vmul.f32 %v152, %v168
    %v170 = vsub.f32 1.0, %v169
    %v171 = vmul.f32 %v168, %v170
    %v172 = vadd.f32 %v168, %v171
    %vm173 = vweird.f32 %v152
    %vm174 = vweird.f32 %v168
    %vm175 = vmor %vm173, %vm174
    %v176 = vsel %vm175, %v168, %v172
    %v177 = vand.u32 2147483647, %v152
    %vm178 = vcmp.eq.f32.partialorder %v177, 8.507059e+37
    %v179 = vand.u32 %v152, 2147483648
    %v180 = vor.u32 1.1754944e-38, %v179
    %v181 = vsel %vm178, %v180, %v176
    %v182 = vmul.f32 %v126, %v181
    %v183 = vperm.slane %v95, 0
    %v184 = vadd.f32 %v167, %v183
    %v185 = vadd.f32 %v182, %v183
    %v186 = vld [vmem:[#allocation2 + $0x50] sm:$0xff]
    %v187 = vld [vmem:[#allocation2 + $0x58] sm:$0xff]
    %v188 = vld [vmem:[#allocation2 + $0x60] sm:$0xff]
    %v189 = vld [vmem:[#allocation2 + $0x68] sm:$0xff]
    %v190 = vld [vmem:[#allocation2 + $0xf4] sm:$0x1]
    %v191 = vperm.slane %v190, 0
    %v193 = vsel %vm96, %v184, 0
    %v196 = vsel %vm96, %v185, 0
    %198 = vmatpush.msra.mxu0 0.0
    %199 = vmatpush.msra.mxu0 0.0
    %200 = vmatpush.msra.mxu0 0.0
    %201 = vmatpush.msra.mxu0 0.0
    %202 = vmatpush.msra.mxu0 0.0
    %203 = vmatpush.msra.mxu0 0.0
    %204 = vmatpush.msra.mxu0 0.0
    %205 = vmatpush.msra.mxu0 0.0
    %206 = vmatpush.msra.mxu0 0.0
    %207 = vmatpush.msra.mxu0 0.0
    %208 = vmatpush.msra.mxu0 0.0
    %209 = vmatpush.msra.mxu0 0.0
    %210 = vmatpush.msra.mxu0 %v189
    %211 = vmatpush.msra.mxu0 %v188
    %212 = vmatpush.msra.mxu0 %v187
    %213 = vmatpush.msra.mxu0 %v186
    %214 = vmatmul.f32.gmra.mxu0 %v193
    %v215 = vpop.f32.mrf.mxu0
    %v216 = vadd.f32 %v191, %v215
    %217 = vmatmul.f32.gmra.mxu0 %v196
    %v218 = vpop.f32.mrf.mxu0
    %v219 = vadd.f32 %v191, %v218
    %220 = vdwg.mxu0
    %223 = vrot.lane.b32.xlu0 %v216, 120
    %v224 = vpop.permute.xlu0 %223
    %225 = vrot.lane.b32.xlu0 %v219, 120
    %v226 = vpop.permute.xlu0 %225
    %227 = vrot.lane.b32.xlu0 %v216, 112
    %v228 = vpop.permute.xlu0 %227
    %229 = vrot.lane.b32.xlu0 %v219, 112
    %v230 = vpop.permute.xlu0 %229
    %231 = vrot.lane.b32.xlu0 %v216, 104
    %v232 = vpop.permute.xlu0 %231
    %233 = vrot.lane.b32.xlu0 %v219, 104
    %v234 = vpop.permute.xlu0 %233
    %235 = vrot.lane.b32.xlu0 %v216, 96
    %v236 = vpop.permute.xlu0 %235
    %vm237 = vcmask 64512
    %v238 = vsel %vm237, %v216, 0
    %v240 = vsel %vm237, %v236, 0
    %242 = vmatpush.xpose.msra.mxu0 0.0
    %243 = vmatpush.xpose.msra.mxu0 0.0
    %244 = vmatpush.xpose.msra.mxu0 0.0
    %245 = vmatpush.xpose.msra.mxu0 0.0
    %246 = vmatpush.xpose.msra.mxu0 0.0
    %247 = vmatpush.xpose.msra.mxu0 0.0
    %248 = vmatpush.xpose.msra.mxu0 0.0
    %249 = vmatpush.xpose.msra.mxu0 0.0
    %250 = vmatpush.xpose.msra.mxu0 0.0
    %251 = vmatpush.xpose.msra.mxu0 0.0
    %252 = vmatpush.xpose.msra.mxu0 0.0
    %253 = vmatpush.xpose.msra.mxu0 0.0
    %254 = vmatpush.xpose.msra.mxu0 0.0
    %255 = vmatpush.xpose.msra.mxu0 0.0
    %256 = vmatpush.xpose.msra.mxu0 0.0
    %257 = vmatpush.xpose.msra.mxu0 %v240
    %258 = vmatmul.f32.gmra.mxu0 %v238
    %v259 = vpop.f32.mrf.mxu0
    %v260 = vadd.f32 0.0, %v259
    %261 = vdwg.mxu0
    %262 = vrot.lane.b32.xlu0 %v219, 96
    %v263 = vpop.permute.xlu0 %262
    %v264 = vsel %vm237, %v219, 0
    %v266 = vsel %vm237, %v263, 0
    %268 = vmatpush.xpose.msra.mxu0 0.0
    %269 = vmatpush.xpose.msra.mxu0 0.0
    %270 = vmatpush.xpose.msra.mxu0 0.0
    %271 = vmatpush.xpose.msra.mxu0 0.0
    %272 = vmatpush.xpose.msra.mxu0 0.0
    %273 = vmatpush.xpose.msra.mxu0 0.0
    %274 = vmatpush.xpose.msra.mxu0 0.0
    %275 = vmatpush.xpose.msra.mxu0 0.0
    %276 = vmatpush.xpose.msra.mxu0 0.0
    %277 = vmatpush.xpose.msra.mxu0 0.0
    %278 = vmatpush.xpose.msra.mxu0 0.0
    %279 = vmatpush.xpose.msra.mxu0 0.0
    %280 = vmatpush.xpose.msra.mxu0 0.0
    %281 = vmatpush.xpose.msra.mxu0 0.0
    %282 = vmatpush.xpose.msra.mxu0 0.0
    %283 = vmatpush.xpose.msra.mxu0 %v266
    %284 = vmatmul.f32.gmra.mxu0 %v264
    %v285 = vpop.f32.mrf.mxu0
    %v286 = vadd.f32 0.0, %v285
    %287 = vdwg.mxu0
    %288 = vrot.lane.b32.xlu0 %v224, 96
    %v289 = vpop.permute.xlu0 %288
    %v290 = vsel %vm237, %v224, 0
    %v292 = vsel %vm237, %v289, 0
    %294 = vmatpush.xpose.msra.mxu0 0.0
    %295 = vmatpush.xpose.msra.mxu0 0.0
    %296 = vmatpush.xpose.msra.mxu0 0.0
    %297 = vmatpush.xpose.msra.mxu0 0.0
    %298 = vmatpush.xpose.msra.mxu0 0.0
    %299 = vmatpush.xpose.msra.mxu0 0.0
    %300 = vmatpush.xpose.msra.mxu0 0.0
    %301 = vmatpush.xpose.msra.mxu0 0.0
    %302 = vmatpush.xpose.msra.mxu0 0.0
    %303 = vmatpush.xpose.msra.mxu0 0.0
    %304 = vmatpush.xpose.msra.mxu0 0.0
    %305 = vmatpush.xpose.msra.mxu0 0.0
    %306 = vmatpush.xpose.msra.mxu0 0.0
    %307 = vmatpush.xpose.msra.mxu0 0.0
    %308 = vmatpush.xpose.msra.mxu0 0.0
    %309 = vmatpush.xpose.msra.mxu0 %v292
    %310 = vmatmul.f32.gmra.mxu0 %v290
    %v311 = vpop.f32.mrf.mxu0
    %v312 = vadd.f32 0.0, %v311
    %313 = vdwg.mxu0
    %314 = vrot.lane.b32.xlu0 %v226, 96
    %v315 = vpop.permute.xlu0 %314
    %v316 = vsel %vm237, %v226, 0
    %v318 = vsel %vm237, %v315, 0
    %320 = vmatpush.xpose.msra.mxu0 0.0
    %321 = vmatpush.xpose.msra.mxu0 0.0
    %322 = vmatpush.xpose.msra.mxu0 0.0
    %323 = vmatpush.xpose.msra.mxu0 0.0
    %324 = vmatpush.xpose.msra.mxu0 0.0
    %325 = vmatpush.xpose.msra.mxu0 0.0
    %326 = vmatpush.xpose.msra.mxu0 0.0
    %327 = vmatpush.xpose.msra.mxu0 0.0
    %328 = vmatpush.xpose.msra.mxu0 0.0
    %329 = vmatpush.xpose.msra.mxu0 0.0
    %330 = vmatpush.xpose.msra.mxu0 0.0
    %331 = vmatpush.xpose.msra.mxu0 0.0
    %332 = vmatpush.xpose.msra.mxu0 0.0
    %333 = vmatpush.xpose.msra.mxu0 0.0
    %334 = vmatpush.xpose.msra.mxu0 0.0
    %335 = vmatpush.xpose.msra.mxu0 %v318
    %336 = vmatmul.f32.gmra.mxu0 %v316
    %v337 = vpop.f32.mrf.mxu0
    %v338 = vadd.f32 0.0, %v337
    %339 = vdwg.mxu0
    %340 = vrot.lane.b32.xlu0 %v228, 96
    %v341 = vpop.permute.xlu0 %340
    %v342 = vsel %vm237, %v228, 0
    %v344 = vsel %vm237, %v341, 0
    %346 = vmatpush.xpose.msra.mxu0 0.0
    %347 = vmatpush.xpose.msra.mxu0 0.0
    %348 = vmatpush.xpose.msra.mxu0 0.0
    %349 = vmatpush.xpose.msra.mxu0 0.0
    %350 = vmatpush.xpose.msra.mxu0 0.0
    %351 = vmatpush.xpose.msra.mxu0 0.0
    %352 = vmatpush.xpose.msra.mxu0 0.0
    %353 = vmatpush.xpose.msra.mxu0 0.0
    %354 = vmatpush.xpose.msra.mxu0 0.0
    %355 = vmatpush.xpose.msra.mxu0 0.0
    %356 = vmatpush.xpose.msra.mxu0 0.0
    %357 = vmatpush.xpose.msra.mxu0 0.0
    %358 = vmatpush.xpose.msra.mxu0 0.0
    %359 = vmatpush.xpose.msra.mxu0 0.0
    %360 = vmatpush.xpose.msra.mxu0 0.0
    %361 = vmatpush.xpose.msra.mxu0 %v344
    %362 = vmatmul.f32.gmra.mxu0 %v342
    %v363 = vpop.f32.mrf.mxu0
    %v364 = vadd.f32 0.0, %v363
    %365 = vdwg.mxu0
    %366 = vrot.lane.b32.xlu0 %v230, 96
    %v367 = vpop.permute.xlu0 %366
    %v368 = vsel %vm237, %v230, 0
    %v370 = vsel %vm237, %v367, 0
    %372 = vmatpush.xpose.msra.mxu0 0.0
    %373 = vmatpush.xpose.msra.mxu0 0.0
    %374 = vmatpush.xpose.msra.mxu0 0.0
    %375 = vmatpush.xpose.msra.mxu0 0.0
    %376 = vmatpush.xpose.msra.mxu0 0.0
    %377 = vmatpush.xpose.msra.mxu0 0.0
    %378 = vmatpush.xpose.msra.mxu0 0.0
    %379 = vmatpush.xpose.msra.mxu0 0.0
    %380 = vmatpush.xpose.msra.mxu0 0.0
    %381 = vmatpush.xpose.msra.mxu0 0.0
    %382 = vmatpush.xpose.msra.mxu0 0.0
    %383 = vmatpush.xpose.msra.mxu0 0.0
    %384 = vmatpush.xpose.msra.mxu0 0.0
    %385 = vmatpush.xpose.msra.mxu0 0.0
    %386 = vmatpush.xpose.msra.mxu0 0.0
    %387 = vmatpush.xpose.msra.mxu0 %v370
    %388 = vmatmul.f32.gmra.mxu0 %v368
    %v389 = vpop.f32.mrf.mxu0
    %v390 = vadd.f32 0.0, %v389
    %391 = vdwg.mxu0
    %392 = vrot.lane.b32.xlu0 %v232, 96
    %v393 = vpop.permute.xlu0 %392
    %v394 = vsel %vm237, %v232, 0
    %v396 = vsel %vm237, %v393, 0
    %398 = vmatpush.xpose.msra.mxu0 0.0
    %399 = vmatpush.xpose.msra.mxu0 0.0
    %400 = vmatpush.xpose.msra.mxu0 0.0
    %401 = vmatpush.xpose.msra.mxu0 0.0
    %402 = vmatpush.xpose.msra.mxu0 0.0
    %403 = vmatpush.xpose.msra.mxu0 0.0
    %404 = vmatpush.xpose.msra.mxu0 0.0
    %405 = vmatpush.xpose.msra.mxu0 0.0
    %406 = vmatpush.xpose.msra.mxu0 0.0
    %407 = vmatpush.xpose.msra.mxu0 0.0
    %408 = vmatpush.xpose.msra.mxu0 0.0
    %409 = vmatpush.xpose.msra.mxu0 0.0
    %410 = vmatpush.xpose.msra.mxu0 0.0
    %411 = vmatpush.xpose.msra.mxu0 0.0
    %412 = vmatpush.xpose.msra.mxu0 0.0
    %413 = vmatpush.xpose.msra.mxu0 %v396
    %414 = vmatmul.f32.gmra.mxu0 %v394
    %v415 = vpop.f32.mrf.mxu0
    %v416 = vadd.f32 0.0, %v415
    %417 = vdwg.mxu0
    %418 = vrot.lane.b32.xlu0 %v234, 96
    %v419 = vpop.permute.xlu0 %418
    %v420 = vsel %vm237, %v234, 0
    %v422 = vsel %vm237, %v419, 0
    %424 = vmatpush.xpose.msra.mxu0 0.0
    %425 = vmatpush.xpose.msra.mxu0 0.0
    %426 = vmatpush.xpose.msra.mxu0 0.0
    %427 = vmatpush.xpose.msra.mxu0 0.0
    %428 = vmatpush.xpose.msra.mxu0 0.0
    %429 = vmatpush.xpose.msra.mxu0 0.0
    %430 = vmatpush.xpose.msra.mxu0 0.0
    %431 = vmatpush.xpose.msra.mxu0 0.0
    %432 = vmatpush.xpose.msra.mxu0 0.0
    %433 = vmatpush.xpose.msra.mxu0 0.0
    %434 = vmatpush.xpose.msra.mxu0 0.0
    %435 = vmatpush.xpose.msra.mxu0 0.0
    %436 = vmatpush.xpose.msra.mxu0 0.0
    %437 = vmatpush.xpose.msra.mxu0 0.0
    %438 = vmatpush.xpose.msra.mxu0 0.0
    %439 = vmatpush.xpose.msra.mxu0 %v422
    %440 = vmatmul.f32.gmra.mxu0 %v420
    %v441 = vpop.f32.mrf.mxu0
    %v442 = vadd.f32 0.0, %v441
    %443 = vdwg.mxu0
    %v444 = vmul.f32 %v260, 0.35355338
    %v445 = vmul.f32 %v286, 0.35355338
    %v446 = vmul.f32 %v312, 0.35355338
    %v447 = vmul.f32 %v338, 0.35355338
    %v448 = vmul.f32 %v364, 0.35355338
    %v449 = vmul.f32 %v390, 0.35355338
    %v450 = vmul.f32 %v416, 0.35355338
    %v451 = vmul.f32 %v442, 0.35355338
    %v452 = vadd.f32 %v444, %v90
    %v453 = vadd.f32 %v445, %v91
    %v454 = vadd.f32 %v446, %v90
    %v455 = vadd.f32 %v447, %v91
    %v456 = vadd.f32 %v448, %v90
    %v457 = vadd.f32 %v449, %v91
    %v458 = vadd.f32 %v450, %v90
    %v459 = vadd.f32 %v451, %v91
    %v460 = vsel %vm237, %v452, -inf
    %461 = vmax.xlane.f32.xlu0 %v460
    %v462 = vpop.xlane.xlu0 %461
    %v463 = vsel %vm237, %v453, -inf
    %464 = vmax.xlane.f32.xlu0 %v463
    %v465 = vpop.xlane.xlu0 %464
    %v466 = vsel %vm237, %v454, -inf
    %467 = vmax.xlane.f32.xlu0 %v466
    %v468 = vpop.xlane.xlu0 %467
    %v469 = vsel %vm237, %v455, -inf
    %470 = vmax.xlane.f32.xlu0 %v469
    %v471 = vpop.xlane.xlu0 %470
    %v472 = vsel %vm237, %v456, -inf
    %473 = vmax.xlane.f32.xlu0 %v472
    %v474 = vpop.xlane.xlu0 %473
    %v475 = vsel %vm237, %v457, -inf
    %476 = vmax.xlane.f32.xlu0 %v475
    %v477 = vpop.xlane.xlu0 %476
    %v478 = vsel %vm237, %v458, -inf
    %479 = vmax.xlane.f32.xlu0 %v478
    %v480 = vpop.xlane.xlu0 %479
    %v481 = vsel %vm237, %v459, -inf
    %482 = vmax.xlane.f32.xlu0 %v481
    %v483 = vpop.xlane.xlu0 %482
    %v484 = vsub.f32 %v452, %v462
    %v485 = vsub.f32 %v453, %v465
    %v486 = vsub.f32 %v454, %v468
    %v487 = vsub.f32 %v455, %v471
    %v488 = vsub.f32 %v456, %v474
    %v489 = vsub.f32 %v457, %v477
    %v490 = vsub.f32 %v458, %v480
    %v491 = vsub.f32 %v459, %v483
    %v492 = vmul.f32 %v484, 1.442695
    %v493 = vpow.pop %v492
    %v494 = vmul.f32 %v485, 1.442695
    %v495 = vpow.pop %v494
    %v496 = vmul.f32 %v486, 1.442695
    %v497 = vpow.pop %v496
    %v498 = vmul.f32 %v487, 1.442695
    %v499 = vpow.pop %v498
    %v500 = vmul.f32 %v488, 1.442695
    %v501 = vpow.pop %v500
    %v502 = vmul.f32 %v489, 1.442695
    %v503 = vpow.pop %v502
    %v504 = vmul.f32 %v490, 1.442695
    %v505 = vpow.pop %v504
    %v506 = vmul.f32 %v491, 1.442695
    %v507 = vpow.pop %v506
    %v508 = vsel %vm237, %v493, 0.0
    %509 = vadd.xlane.f32.xlu0 %v508
    %v510 = vpop.xlane.xlu0 %509
    %v511 = vsel %vm237, %v495, 0.0
    %512 = vadd.xlane.f32.xlu0 %v511
    %v513 = vpop.xlane.xlu0 %512
    %v514 = vsel %vm237, %v497, 0.0
    %515 = vadd.xlane.f32.xlu0 %v514
    %v516 = vpop.xlane.xlu0 %515
    %v517 = vsel %vm237, %v499, 0.0
    %518 = vadd.xlane.f32.xlu0 %v517
    %v519 = vpop.xlane.xlu0 %518
    %v520 = vsel %vm237, %v501, 0.0
    %521 = vadd.xlane.f32.xlu0 %v520
    %v522 = vpop.xlane.xlu0 %521
    %v523 = vsel %vm237, %v503, 0.0
    %524 = vadd.xlane.f32.xlu0 %v523
    %v525 = vpop.xlane.xlu0 %524
    %v526 = vsel %vm237, %v505, 0.0
    %527 = vadd.xlane.f32.xlu0 %v526
    %v528 = vpop.xlane.xlu0 %527
    %v529 = vsel %vm237, %v507, 0.0
    %530 = vadd.xlane.f32.xlu0 %v529
    %v531 = vpop.xlane.xlu0 %530
    %v532 = vrcp.pop %v510
    %v533 = vmul.f32 %v510, %v532
    %v534 = vsub.f32 1.0, %v533
    %v535 = vmul.f32 %v532, %v534
    %v536 = vadd.f32 %v532, %v535
    %vm537 = vweird.f32 %v510
    %vm538 = vweird.f32 %v532
    %vm539 = vmor %vm537, %vm538
    %v540 = vsel %vm539, %v532, %v536
    %v541 = vand.u32 2147483647, %v510
    %vm542 = vcmp.eq.f32.partialorder %v541, 8.507059e+37
    %v543 = vand.u32 %v510, 2147483648
    %v544 = vor.u32 1.1754944e-38, %v543
    %v545 = vsel %vm542, %v544, %v540
    %v546 = vmul.f32 %v493, %v545
    %v547 = vrcp.pop %v513
    %v548 = vmul.f32 %v513, %v547
    %v549 = vsub.f32 1.0, %v548
    %v550 = vmul.f32 %v547, %v549
    %v551 = vadd.f32 %v547, %v550
    %vm552 = vweird.f32 %v513
    %vm553 = vweird.f32 %v547
    %vm554 = vmor %vm552, %vm553
    %v555 = vsel %vm554, %v547, %v551
    %v556 = vand.u32 2147483647, %v513
    %vm557 = vcmp.eq.f32.partialorder %v556, 8.507059e+37
    %v558 = vand.u32 %v513, 2147483648
    %v559 = vor.u32 1.1754944e-38, %v558
    %v560 = vsel %vm557, %v559, %v555
    %v561 = vmul.f32 %v495, %v560
    %v562 = vrcp.pop %v516
    %v563 = vmul.f32 %v516, %v562
    %v564 = vsub.f32 1.0, %v563
    %v565 = vmul.f32 %v562, %v564
    %v566 = vadd.f32 %v562, %v565
    %vm567 = vweird.f32 %v516
    %vm568 = vweird.f32 %v562
    %vm569 = vmor %vm567, %vm568
    %v570 = vsel %vm569, %v562, %v566
    %v571 = vand.u32 2147483647, %v516
    %vm572 = vcmp.eq.f32.partialorder %v571, 8.507059e+37
    %v573 = vand.u32 %v516, 2147483648
    %v574 = vor.u32 1.1754944e-38, %v573
    %v575 = vsel %vm572, %v574, %v570
    %v576 = vmul.f32 %v497, %v575
    %v577 = vrcp.pop %v519
    %v578 = vmul.f32 %v519, %v577
    %v579 = vsub.f32 1.0, %v578
    %v580 = vmul.f32 %v577, %v579
    %v581 = vadd.f32 %v577, %v580
    %vm582 = vweird.f32 %v519
    %vm583 = vweird.f32 %v577
    %vm584 = vmor %vm582, %vm583
    %v585 = vsel %vm584, %v577, %v581
    %v586 = vand.u32 2147483647, %v519
    %vm587 = vcmp.eq.f32.partialorder %v586, 8.507059e+37
    %v588 = vand.u32 %v519, 2147483648
    %v589 = vor.u32 1.1754944e-38, %v588
    %v590 = vsel %vm587, %v589, %v585
    %v591 = vmul.f32 %v499, %v590
    %v592 = vrcp.pop %v522
    %v593 = vmul.f32 %v522, %v592
    %v594 = vsub.f32 1.0, %v593
    %v595 = vmul.f32 %v592, %v594
    %v596 = vadd.f32 %v592, %v595
    %vm597 = vweird.f32 %v522
    %vm598 = vweird.f32 %v592
    %vm599 = vmor %vm597, %vm598
    %v600 = vsel %vm599, %v592, %v596
    %v601 = vand.u32 2147483647, %v522
    %vm602 = vcmp.eq.f32.partialorder %v601, 8.507059e+37
    %v603 = vand.u32 %v522, 2147483648
    %v604 = vor.u32 1.1754944e-38, %v603
    %v605 = vsel %vm602, %v604, %v600
    %v606 = vmul.f32 %v501, %v605
    %v607 = vrcp.pop %v525
    %v608 = vmul.f32 %v525, %v607
    %v609 = vsub.f32 1.0, %v608
    %v610 = vmul.f32 %v607, %v609
    %v611 = vadd.f32 %v607, %v610
    %vm612 = vweird.f32 %v525
    %vm613 = vweird.f32 %v607
    %vm614 = vmor %vm612, %vm613
    %v615 = vsel %vm614, %v607, %v611
    %v616 = vand.u32 2147483647, %v525
    %vm617 = vcmp.eq.f32.partialorder %v616, 8.507059e+37
    %v618 = vand.u32 %v525, 2147483648
    %v619 = vor.u32 1.1754944e-38, %v618
    %v620 = vsel %vm617, %v619, %v615
    %v621 = vmul.f32 %v503, %v620
    %v622 = vrcp.pop %v528
    %v623 = vmul.f32 %v528, %v622
    %v624 = vsub.f32 1.0, %v623
    %v625 = vmul.f32 %v622, %v624
    %v626 = vadd.f32 %v622, %v625
    %vm627 = vweird.f32 %v528
    %vm628 = vweird.f32 %v622
    %vm629 = vmor %vm627, %vm628
    %v630 = vsel %vm629, %v622, %v626
    %v631 = vand.u32 2147483647, %v528
    %vm632 = vcmp.eq.f32.partialorder %v631, 8.507059e+37
    %v633 = vand.u32 %v528, 2147483648
    %v634 = vor.u32 1.1754944e-38, %v633
    %v635 = vsel %vm632, %v634, %v630
    %v636 = vmul.f32 %v505, %v635
    %v637 = vrcp.pop %v531
    %v638 = vmul.f32 %v531, %v637
    %v639 = vsub.f32 1.0, %v638
    %v640 = vmul.f32 %v637, %v639
    %v641 = vadd.f32 %v637, %v640
    %vm642 = vweird.f32 %v531
    %vm643 = vweird.f32 %v637
    %vm644 = vmor %vm642, %vm643
    %v645 = vsel %vm644, %v637, %v641
    %v646 = vand.u32 2147483647, %v531
    %vm647 = vcmp.eq.f32.partialorder %v646, 8.507059e+37
    %v648 = vand.u32 %v531, 2147483648
    %v649 = vor.u32 1.1754944e-38, %v648
    %v650 = vsel %vm647, %v649, %v645
    %v651 = vmul.f32 %v507, %v650
    %652 = vrot.lane.b32.xlu0 %v216, 64
    %v653 = vpop.permute.xlu0 %652
    %v656 = vsel %vm237, %v546, 0
    %658 = vmatpush.msra.mxu0 0.0
    %659 = vmatpush.msra.mxu0 0.0
    %660 = vmatpush.msra.mxu0 0.0
    %661 = vmatpush.msra.mxu0 0.0
    %662 = vmatpush.msra.mxu0 0.0
    %663 = vmatpush.msra.mxu0 0.0
    %664 = vmatpush.msra.mxu0 0.0
    %665 = vmatpush.msra.mxu0 0.0
    %666 = vmatpush.msra.mxu0 0.0
    %667 = vmatpush.msra.mxu0 0.0
    %668 = vmatpush.msra.mxu0 0.0
    %669 = vmatpush.msra.mxu0 0.0
    %670 = vmatpush.msra.mxu0 0.0
    %671 = vmatpush.msra.mxu0 0.0
    %672 = vmatpush.msra.mxu0 0.0
    %673 = vmatpush.msra.mxu0 %v653
    %674 = vmatmul.f32.gmra.mxu0 %v656
    %v675 = vpop.f32.mrf.mxu0
    %v676 = vadd.f32 0.0, %v675
    %677 = vdwg.mxu0
    %678 = vrot.lane.b32.xlu0 %v219, 64
    %v679 = vpop.permute.xlu0 %678
    %v682 = vsel %vm237, %v561, 0
    %684 = vmatpush.msra.mxu0 0.0
    %685 = vmatpush.msra.mxu0 0.0
    %686 = vmatpush.msra.mxu0 0.0
    %687 = vmatpush.msra.mxu0 0.0
    %688 = vmatpush.msra.mxu0 0.0
    %689 = vmatpush.msra.mxu0 0.0
    %690 = vmatpush.msra.mxu0 0.0
    %691 = vmatpush.msra.mxu0 0.0
    %692 = vmatpush.msra.mxu0 0.0
    %693 = vmatpush.msra.mxu0 0.0
    %694 = vmatpush.msra.mxu0 0.0
    %695 = vmatpush.msra.mxu0 0.0
    %696 = vmatpush.msra.mxu0 0.0
    %697 = vmatpush.msra.mxu0 0.0
    %698 = vmatpush.msra.mxu0 0.0
    %699 = vmatpush.msra.mxu0 %v679
    %700 = vmatmul.f32.gmra.mxu0 %v682
    %v701 = vpop.f32.mrf.mxu0
    %v702 = vadd.f32 0.0, %v701
    %703 = vdwg.mxu0
    %704 = vrot.lane.b32.xlu0 %v224, 64
    %v705 = vpop.permute.xlu0 %704
    %v708 = vsel %vm237, %v576, 0
    %710 = vmatpush.msra.mxu0 0.0
    %711 = vmatpush.msra.mxu0 0.0
    %712 = vmatpush.msra.mxu0 0.0
    %713 = vmatpush.msra.mxu0 0.0
    %714 = vmatpush.msra.mxu0 0.0
    %715 = vmatpush.msra.mxu0 0.0
    %716 = vmatpush.msra.mxu0 0.0
    %717 = vmatpush.msra.mxu0 0.0
    %718 = vmatpush.msra.mxu0 0.0
    %719 = vmatpush.msra.mxu0 0.0
    %720 = vmatpush.msra.mxu0 0.0
    %721 = vmatpush.msra.mxu0 0.0
    %722 = vmatpush.msra.mxu0 0.0
    %723 = vmatpush.msra.mxu0 0.0
    %724 = vmatpush.msra.mxu0 0.0
    %725 = vmatpush.msra.mxu0 %v705
    %726 = vmatmul.f32.gmra.mxu0 %v708
    %v727 = vpop.f32.mrf.mxu0
    %v728 = vadd.f32 0.0, %v727
    %729 = vdwg.mxu0
    %730 = vrot.lane.b32.xlu0 %v226, 64
    %v731 = vpop.permute.xlu0 %730
    %v734 = vsel %vm237, %v591, 0
    %736 = vmatpush.msra.mxu0 0.0
    %737 = vmatpush.msra.mxu0 0.0
    %738 = vmatpush.msra.mxu0 0.0
    %739 = vmatpush.msra.mxu0 0.0
    %740 = vmatpush.msra.mxu0 0.0
    %741 = vmatpush.msra.mxu0 0.0
    %742 = vmatpush.msra.mxu0 0.0
    %743 = vmatpush.msra.mxu0 0.0
    %744 = vmatpush.msra.mxu0 0.0
    %745 = vmatpush.msra.mxu0 0.0
    %746 = vmatpush.msra.mxu0 0.0
    %747 = vmatpush.msra.mxu0 0.0
    %748 = vmatpush.msra.mxu0 0.0
    %749 = vmatpush.msra.mxu0 0.0
    %750 = vmatpush.msra.mxu0 0.0
    %751 = vmatpush.msra.mxu0 %v731
    %752 = vmatmul.f32.gmra.mxu0 %v734
    %v753 = vpop.f32.mrf.mxu0
    %v754 = vadd.f32 0.0, %v753
    %755 = vdwg.mxu0
    %756 = vrot.lane.b32.xlu0 %v228, 64
    %v757 = vpop.permute.xlu0 %756
    %v760 = vsel %vm237, %v606, 0
    %762 = vmatpush.msra.mxu0 0.0
    %763 = vmatpush.msra.mxu0 0.0
    %764 = vmatpush.msra.mxu0 0.0
    %765 = vmatpush.msra.mxu0 0.0
    %766 = vmatpush.msra.mxu0 0.0
    %767 = vmatpush.msra.mxu0 0.0
    %768 = vmatpush.msra.mxu0 0.0
    %769 = vmatpush.msra.mxu0 0.0
    %770 = vmatpush.msra.mxu0 0.0
    %771 = vmatpush.msra.mxu0 0.0
    %772 = vmatpush.msra.mxu0 0.0
    %773 = vmatpush.msra.mxu0 0.0
    %774 = vmatpush.msra.mxu0 0.0
    %775 = vmatpush.msra.mxu0 0.0
    %776 = vmatpush.msra.mxu0 0.0
    %777 = vmatpush.msra.mxu0 %v757
    %778 = vmatmul.f32.gmra.mxu0 %v760
    %v779 = vpop.f32.mrf.mxu0
    %v780 = vadd.f32 0.0, %v779
    %781 = vdwg.mxu0
    %782 = vrot.lane.b32.xlu0 %v230, 64
    %v783 = vpop.permute.xlu0 %782
    %v786 = vsel %vm237, %v621, 0
    %788 = vmatpush.msra.mxu0 0.0
    %789 = vmatpush.msra.mxu0 0.0
    %790 = vmatpush.msra.mxu0 0.0
    %791 = vmatpush.msra.mxu0 0.0
    %792 = vmatpush.msra.mxu0 0.0
    %793 = vmatpush.msra.mxu0 0.0
    %794 = vmatpush.msra.mxu0 0.0
    %795 = vmatpush.msra.mxu0 0.0
    %796 = vmatpush.msra.mxu0 0.0
    %797 = vmatpush.msra.mxu0 0.0
    %798 = vmatpush.msra.mxu0 0.0
    %799 = vmatpush.msra.mxu0 0.0
    %800 = vmatpush.msra.mxu0 0.0
    %801 = vmatpush.msra.mxu0 0.0
    %802 = vmatpush.msra.mxu0 0.0
    %803 = vmatpush.msra.mxu0 %v783
    %804 = vmatmul.f32.gmra.mxu0 %v786
    %v805 = vpop.f32.mrf.mxu0
    %v806 = vadd.f32 0.0, %v805
    %807 = vdwg.mxu0
    %808 = vrot.lane.b32.xlu0 %v232, 64
    %v809 = vpop.permute.xlu0 %808
    %v812 = vsel %vm237, %v636, 0
    %814 = vmatpush.msra.mxu0 0.0
    %815 = vmatpush.msra.mxu0 0.0
    %816 = vmatpush.msra.mxu0 0.0
    %817 = vmatpush.msra.mxu0 0.0
    %818 = vmatpush.msra.mxu0 0.0
    %819 = vmatpush.msra.mxu0 0.0
    %820 = vmatpush.msra.mxu0 0.0
    %821 = vmatpush.msra.mxu0 0.0
    %822 = vmatpush.msra.mxu0 0.0
    %823 = vmatpush.msra.mxu0 0.0
    %824 = vmatpush.msra.mxu0 0.0
    %825 = vmatpush.msra.mxu0 0.0
    %826 = vmatpush.msra.mxu0 0.0
    %827 = vmatpush.msra.mxu0 0.0
    %828 = vmatpush.msra.mxu0 0.0
    %829 = vmatpush.msra.mxu0 %v809
    %830 = vmatmul.f32.gmra.mxu0 %v812
    %v831 = vpop.f32.mrf.mxu0
    %v832 = vadd.f32 0.0, %v831
    %833 = vdwg.mxu0
    %834 = vrot.lane.b32.xlu0 %v234, 64
    %v835 = vpop.permute.xlu0 %834
    %v838 = vsel %vm237, %v651, 0
    %840 = vmatpush.msra.mxu0 0.0
    %841 = vmatpush.msra.mxu0 0.0
    %842 = vmatpush.msra.mxu0 0.0
    %843 = vmatpush.msra.mxu0 0.0
    %844 = vmatpush.msra.mxu0 0.0
    %845 = vmatpush.msra.mxu0 0.0
    %846 = vmatpush.msra.mxu0 0.0
    %847 = vmatpush.msra.mxu0 0.0
    %848 = vmatpush.msra.mxu0 0.0
    %849 = vmatpush.msra.mxu0 0.0
    %850 = vmatpush.msra.mxu0 0.0
    %851 = vmatpush.msra.mxu0 0.0
    %852 = vmatpush.msra.mxu0 0.0
    %853 = vmatpush.msra.mxu0 0.0
    %854 = vmatpush.msra.mxu0 0.0
    %855 = vmatpush.msra.mxu0 %v835
    %856 = vmatmul.f32.gmra.mxu0 %v838
    %v857 = vpop.f32.mrf.mxu0
    %v858 = vadd.f32 0.0, %v857
    %859 = vdwg.mxu0
    %862 = vrot.lane.b32.xlu0 %v728, 8
    %v863 = vpop.permute.xlu0 %862
    %864 = vrot.lane.b32.xlu0 %v754, 8
    %v865 = vpop.permute.xlu0 %864
    %870 = vrot.lane.b32.xlu0 %v780, 16
    %v871 = vpop.permute.xlu0 %870
    %872 = vrot.lane.b32.xlu0 %v806, 16
    %v873 = vpop.permute.xlu0 %872
    %878 = vrot.lane.b32.xlu0 %v832, 24
    %v879 = vpop.permute.xlu0 %878
    %880 = vrot.lane.b32.xlu0 %v858, 24
    %v881 = vpop.permute.xlu0 %880
    %v884 = vsel %vm237, %v676, %v863
    %v885 = vsel %vm237, %v702, %v865
    %vm886 = vcmask 130048
    %v887 = vsel %vm886, %v884, %v871
    %v888 = vsel %vm886, %v885, %v873
    %vm889 = vcmask 195584
    %v890 = vsel %vm889, %v887, %v879
    %v891 = vsel %vm889, %v888, %v881
    %v892 = vld [vmem:[#allocation2 + $0x70] sm:$0xff]
    %v893 = vld [vmem:[#allocation2 + $0x78] sm:$0xff]
    %v894 = vld [vmem:[#allocation2 + $0x80] sm:$0xff]
    %v895 = vld [vmem:[#allocation2 + $0x88] sm:$0xff]
    %v897 = vsel %vm96, %v890, 0
    %v900 = vsel %vm96, %v891, 0
    %902 = vmatpush.msra.mxu0 0.0
    %903 = vmatpush.msra.mxu0 0.0
    %904 = vmatpush.msra.mxu0 0.0
    %905 = vmatpush.msra.mxu0 0.0
    %906 = vmatpush.msra.mxu0 0.0
    %907 = vmatpush.msra.mxu0 0.0
    %908 = vmatpush.msra.mxu0 0.0
    %909 = vmatpush.msra.mxu0 0.0
    %910 = vmatpush.msra.mxu0 0.0
    %911 = vmatpush.msra.mxu0 0.0
    %912 = vmatpush.msra.mxu0 0.0
    %913 = vmatpush.msra.mxu0 0.0
    %914 = vmatpush.msra.mxu0 %v895
    %915 = vmatpush.msra.mxu0 %v894
    %916 = vmatpush.msra.mxu0 %v893
    %917 = vmatpush.msra.mxu0 %v892
    %918 = vmatmul.f32.gmra.mxu0 %v897
    %v919 = vpop.f32.mrf.mxu0
    %v920 = vadd.f32 0.0, %v919
    %921 = vmatmul.f32.gmra.mxu0 %v900
    %v922 = vpop.f32.mrf.mxu0
    %v923 = vadd.f32 0.0, %v922
    %924 = vdwg.mxu0
    %v925 = vadd.f32 %v82, %v920
    %v926 = vadd.f32 %v85, %v923
    %v927 = vld [vmem:[#allocation2 + $0xf5] sm:$0x1]
    %v928 = vperm.slane %v927, 0
    %v929 = vadd.f32 %v925, %v928
    %v930 = vadd.f32 %v926, %v928
    %v931 = vld [vmem:[#allocation2 + $0xf2] sm:$0x1]
    %v932 = vld [vmem:[#allocation2 + $0xf3] sm:$0x1]
    %v933 = vsel %vm96, %v929, 0.0
    %934 = vadd.xlane.f32.xlu0 %v933
    %v935 = vpop.xlane.xlu0 %934
    %v936 = vsel %vm96, %v930, 0.0
    %937 = vadd.xlane.f32.xlu0 %v936
    %v938 = vpop.xlane.xlu0 %937
    %v939 = vmul.f32 %v935, %v109
    %v940 = vmul.f32 %v938, %v109
    %v941 = vsub.f32 %v929, %v939
    %v942 = vsub.f32 %v930, %v940
    %v943 = vmul.f32 %v941, %v941
    %v944 = vmul.f32 %v942, %v942
    %v945 = vsel %vm96, %v943, 0.0
    %946 = vadd.xlane.f32.xlu0 %v945
    %v947 = vpop.xlane.xlu0 %946
    %v948 = vsel %vm96, %v944, 0.0
    %949 = vadd.xlane.f32.xlu0 %v948
    %v950 = vpop.xlane.xlu0 %949
    %v951 = vmul.f32 %v947, 0.032258064
    %v952 = vmul.f32 %v950, 0.032258064
    %v953 = vperm.slane %v931, 0
    %v954 = vmul.f32 %v953, %v941
    %v955 = vmul.f32 %v953, %v942
    %v956 = vrsqrt.pop %v951
    %v957 = vmul.f32 %v956, %v951
    %v958 = vmul.f32 %v957, %v956
    %v959 = vmul.f32 0.5, %v958
    %v960 = vsub.f32 1.5, %v959
    %v961 = vmul.f32 %v956, %v960
    %v962 = vmul.f32 %v951, %v961
    %vm963 = vcmp.eq.f32.partialorder %v951, inf
    %v964 = vsel %vm963, %v951, %v962
    %vm965 = vcmp.eq.f32.partialorder %v951, 0.0
    %v966 = vand.u32 %v951, 2147483648
    %v967 = vsel %vm965, %v966, %v964
    %v968 = vrsqrt.pop %v952
    %v969 = vmul.f32 %v968, %v952
    %v970 = vmul.f32 %v969, %v968
    %v971 = vmul.f32 0.5, %v970
    %v972 = vsub.f32 1.5, %v971
    %v973 = vmul.f32 %v968, %v972
    %v974 = vmul.f32 %v952, %v973
    %vm975 = vcmp.eq.f32.partialorder %v952, inf
    %v976 = vsel %vm975, %v952, %v974
    %vm977 = vcmp.eq.f32.partialorder %v952, 0.0
    %v978 = vand.u32 %v952, 2147483648
    %v979 = vsel %vm977, %v978, %v976
    %v980 = vadd.f32 %v967, 1e-06
    %v981 = vadd.f32 %v979, 1e-06
    %v982 = vrcp.pop %v980
    %v983 = vmul.f32 %v980, %v982
    %v984 = vsub.f32 1.0, %v983
    %v985 = vmul.f32 %v982, %v984
    %v986 = vadd.f32 %v982, %v985
    %vm987 = vweird.f32 %v980
    %vm988 = vweird.f32 %v982
    %vm989 = vmor %vm987, %vm988
    %v990 = vsel %vm989, %v982, %v986
    %v991 = vand.u32 2147483647, %v980
    %vm992 = vcmp.eq.f32.partialorder %v991, 8.507059e+37
    %v993 = vand.u32 %v980, 2147483648
    %v994 = vor.u32 1.1754944e-38, %v993
    %v995 = vsel %vm992, %v994, %v990
    %v996 = vmul.f32 %v954, %v995
    %v997 = vrcp.pop %v981
    %v998 = vmul.f32 %v981, %v997
    %v999 = vsub.f32 1.0, %v998
    %v1000 = vmul.f32 %v997, %v999
    %v1001 = vadd.f32 %v997, %v1000
    %vm1002 = vweird.f32 %v981
    %vm1003 = vweird.f32 %v997
    %vm1004 = vmor %vm1002, %vm1003
    %v1005 = vsel %vm1004, %v997, %v1001
    %v1006 = vand.u32 2147483647, %v981
    %vm1007 = vcmp.eq.f32.partialorder %v1006, 8.507059e+37
    %v1008 = vand.u32 %v981, 2147483648
    %v1009 = vor.u32 1.1754944e-38, %v1008
    %v1010 = vsel %vm1007, %v1009, %v1005
    %v1011 = vmul.f32 %v955, %v1010
    %v1012 = vperm.slane %v932, 0
    %v1013 = vadd.f32 %v996, %v1012
    %v1014 = vadd.f32 %v1011, %v1012
    %v1015 = vld [vmem:[#allocation2 + $0x90] sm:$0xff]
    %v1016 = vld [vmem:[#allocation2 + $0x98] sm:$0xff]
    %v1017 = vld [vmem:[#allocation2 + $0xa0] sm:$0xff]
    %v1018 = vld [vmem:[#allocation2 + $0xa8] sm:$0xff]
    %v1019 = vld [vmem:[#allocation2 + $0xf6] sm:$0x1]
    %v1020 = vperm.slane %v1019, 0
    %v1022 = vsel %vm96, %v1013, 0
    %v1025 = vsel %vm96, %v1014, 0
    %1027 = vmatpush.msra.mxu0 0.0
    %1028 = vmatpush.msra.mxu0 0.0
    %1029 = vmatpush.msra.mxu0 0.0
    %1030 = vmatpush.msra.mxu0 0.0
    %1031 = vmatpush.msra.mxu0 0.0
    %1032 = vmatpush.msra.mxu0 0.0
    %1033 = vmatpush.msra.mxu0 0.0
    %1034 = vmatpush.msra.mxu0 0.0
    %1035 = vmatpush.msra.mxu0 0.0
    %1036 = vmatpush.msra.mxu0 0.0
    %1037 = vmatpush.msra.mxu0 0.0
    %1038 = vmatpush.msra.mxu0 0.0
    %1039 = vmatpush.msra.mxu0 %v1018
    %1040 = vmatpush.msra.mxu0 %v1017
    %1041 = vmatpush.msra.mxu0 %v1016
    %1042 = vmatpush.msra.mxu0 %v1015
    %1043 = vmatmul.f32.gmra.mxu0 %v1022
    %v1044 = vpop.f32.mrf.mxu0
    %v1045 = vadd.f32 %v1020, %v1044
    %1046 = vmatmul.f32.gmra.mxu0 %v1025
    %v1047 = vpop.f32.mrf.mxu0
    %v1048 = vadd.f32 %v1020, %v1047
    %1049 = vdwg.mxu0
    %v1050 = vmax.f32 %v1045, 0.0
    %v1051 = vmax.f32 %v1048, 0.0
    %v1052 = vld [vmem:[#allocation2 + $0xb0] sm:$0xff]
    %v1053 = vld [vmem:[#allocation2 + $0xb8] sm:$0xff]
    %v1054 = vld [vmem:[#allocation2 + $0xc0] sm:$0xff]
    %v1055 = vld [vmem:[#allocation2 + $0xc8] sm:$0xff]
    %v1056 = vld [vmem:[#allocation2 + $0xd0] sm:$0xff]
    %v1057 = vld [vmem:[#allocation2 + $0xd8] sm:$0xff]
    %v1058 = vld [vmem:[#allocation2 + $0xe0] sm:$0xff]
    %v1059 = vld [vmem:[#allocation2 + $0xe8] sm:$0xff]
    %v1061 = vsel %vm57, %v1050, 0
    %v1064 = vsel %vm57, %v1051, 0
    %1066 = vmatpush.msra.mxu0 0.0
    %1067 = vmatpush.msra.mxu0 0.0
    %1068 = vmatpush.msra.mxu0 0.0
    %1069 = vmatpush.msra.mxu0 0.0
    %1070 = vmatpush.msra.mxu0 0.0
    %1071 = vmatpush.msra.mxu0 0.0
    %1072 = vmatpush.msra.mxu0 0.0
    %1073 = vmatpush.msra.mxu0 0.0
    %1074 = vmatpush.msra.mxu0 %v1059
    %1075 = vmatpush.msra.mxu0 %v1058
    %1076 = vmatpush.msra.mxu0 %v1057
    %1077 = vmatpush.msra.mxu0 %v1056
    %1078 = vmatpush.msra.mxu0 %v1055
    %1079 = vmatpush.msra.mxu0 %v1054
    %1080 = vmatpush.msra.mxu0 %v1053
    %1081 = vmatpush.msra.mxu0 %v1052
    %1082 = vmatmul.f32.gmra.mxu0 %v1061
    %v1083 = vpop.f32.mrf.mxu0
    %v1084 = vadd.f32 0.0, %v1083
    %1085 = vmatmul.f32.gmra.mxu0 %v1064
    %v1086 = vpop.f32.mrf.mxu0
    %v1087 = vadd.f32 0.0, %v1086
    %1088 = vdwg.mxu0
    %v1089 = vadd.f32 %v929, %v1084
    %v1090 = vadd.f32 %v930, %v1087
    %v1091 = vld [vmem:[#allocation2 + $0xf7] sm:$0x1]
    %v1092 = vperm.slane %v1091, 0
    %v1093 = vadd.f32 %v1089, %v1092
    %v1094 = vadd.f32 %v1090, %v1092
    %v1095 = vld [vmem:[#allocation2 + $0x198] sm:$0x1]
    %v1096 = vld [vmem:[#allocation2 + $0x199] sm:$0x1]
    %v1097 = vsel %vm96, %v1093, 0.0
    %1098 = vadd.xlane.f32.xlu0 %v1097
    %v1099 = vpop.xlane.xlu0 %1098
    %v1100 = vsel %vm96, %v1094, 0.0
    %1101 = vadd.xlane.f32.xlu0 %v1100
    %v1102 = vpop.xlane.xlu0 %1101
    %v1103 = vmul.f32 %v1099, %v109
    %v1104 = vmul.f32 %v1102, %v109
    %v1105 = vsub.f32 %v1093, %v1103
    %v1106 = vsub.f32 %v1094, %v1104
    %v1107 = vmul.f32 %v1105, %v1105
    %v1108 = vmul.f32 %v1106, %v1106
    %v1109 = vsel %vm96, %v1107, 0.0
    %1110 = vadd.xlane.f32.xlu0 %v1109
    %v1111 = vpop.xlane.xlu0 %1110
    %v1112 = vsel %vm96, %v1108, 0.0
    %1113 = vadd.xlane.f32.xlu0 %v1112
    %v1114 = vpop.xlane.xlu0 %1113
    %v1115 = vmul.f32 %v1111, 0.032258064
    %v1116 = vmul.f32 %v1114, 0.032258064
    %v1117 = vperm.slane %v1095, 0
    %v1118 = vmul.f32 %v1117, %v1105
    %v1119 = vmul.f32 %v1117, %v1106
    %v1120 = vrsqrt.pop %v1115
    %v1121 = vmul.f32 %v1120, %v1115
    %v1122 = vmul.f32 %v1121, %v1120
    %v1123 = vmul.f32 0.5, %v1122
    %v1124 = vsub.f32 1.5, %v1123
    %v1125 = vmul.f32 %v1120, %v1124
    %v1126 = vmul.f32 %v1115, %v1125
    %vm1127 = vcmp.eq.f32.partialorder %v1115, inf
    %v1128 = vsel %vm1127, %v1115, %v1126
    %vm1129 = vcmp.eq.f32.partialorder %v1115, 0.0
    %v1130 = vand.u32 %v1115, 2147483648
    %v1131 = vsel %vm1129, %v1130, %v1128
    %v1132 = vrsqrt.pop %v1116
    %v1133 = vmul.f32 %v1132, %v1116
    %v1134 = vmul.f32 %v1133, %v1132
    %v1135 = vmul.f32 0.5, %v1134
    %v1136 = vsub.f32 1.5, %v1135
    %v1137 = vmul.f32 %v1132, %v1136
    %v1138 = vmul.f32 %v1116, %v1137
    %vm1139 = vcmp.eq.f32.partialorder %v1116, inf
    %v1140 = vsel %vm1139, %v1116, %v1138
    %vm1141 = vcmp.eq.f32.partialorder %v1116, 0.0
    %v1142 = vand.u32 %v1116, 2147483648
    %v1143 = vsel %vm1141, %v1142, %v1140
    %v1144 = vadd.f32 %v1131, 1e-06
    %v1145 = vadd.f32 %v1143, 1e-06
    %v1146 = vrcp.pop %v1144
    %v1147 = vmul.f32 %v1144, %v1146
    %v1148 = vsub.f32 1.0, %v1147
    %v1149 = vmul.f32 %v1146, %v1148
    %v1150 = vadd.f32 %v1146, %v1149
    %vm1151 = vweird.f32 %v1144
    %vm1152 = vweird.f32 %v1146
    %vm1153 = vmor %vm1151, %vm1152
    %v1154 = vsel %vm1153, %v1146, %v1150
    %v1155 = vand.u32 2147483647, %v1144
    %vm1156 = vcmp.eq.f32.partialorder %v1155, 8.507059e+37
    %v1157 = vand.u32 %v1144, 2147483648
    %v1158 = vor.u32 1.1754944e-38, %v1157
    %v1159 = vsel %vm1156, %v1158, %v1154
    %v1160 = vmul.f32 %v1118, %v1159
    %v1161 = vrcp.pop %v1145
    %v1162 = vmul.f32 %v1145, %v1161
    %v1163 = vsub.f32 1.0, %v1162
    %v1164 = vmul.f32 %v1161, %v1163
    %v1165 = vadd.f32 %v1161, %v1164
    %vm1166 = vweird.f32 %v1145
    %vm1167 = vweird.f32 %v1161
    %vm1168 = vmor %vm1166, %vm1167
    %v1169 = vsel %vm1168, %v1161, %v1165
    %v1170 = vand.u32 2147483647, %v1145
    %vm1171 = vcmp.eq.f32.partialorder %v1170, 8.507059e+37
    %v1172 = vand.u32 %v1145, 2147483648
    %v1173 = vor.u32 1.1754944e-38, %v1172
    %v1174 = vsel %vm1171, %v1173, %v1169
    %v1175 = vmul.f32 %v1119, %v1174
    %v1176 = vperm.slane %v1096, 0
    %v1177 = vadd.f32 %v1160, %v1176
    %v1178 = vadd.f32 %v1175, %v1176
    %v1179 = vld [vmem:[#allocation2 + $0xf8] sm:$0xff]
    %v1180 = vld [vmem:[#allocation2 + $0x100] sm:$0xff]
    %v1181 = vld [vmem:[#allocation2 + $0x108] sm:$0xff]
    %v1182 = vld [vmem:[#allocation2 + $0x110] sm:$0xff]
    %v1183 = vld [vmem:[#allocation2 + $0x19c] sm:$0x1]
    %v1184 = vperm.slane %v1183, 0
    %v1186 = vsel %vm96, %v1177, 0
    %v1189 = vsel %vm96, %v1178, 0
    %1191 = vmatpush.msra.mxu0 0.0
    %1192 = vmatpush.msra.mxu0 0.0
    %1193 = vmatpush.msra.mxu0 0.0
    %1194 = vmatpush.msra.mxu0 0.0
    %1195 = vmatpush.msra.mxu0 0.0
    %1196 = vmatpush.msra.mxu0 0.0
    %1197 = vmatpush.msra.mxu0 0.0
    %1198 = vmatpush.msra.mxu0 0.0
    %1199 = vmatpush.msra.mxu0 0.0
    %1200 = vmatpush.msra.mxu0 0.0
    %1201 = vmatpush.msra.mxu0 0.0
    %1202 = vmatpush.msra.mxu0 0.0
    %1203 = vmatpush.msra.mxu0 %v1182
    %1204 = vmatpush.msra.mxu0 %v1181
    %1205 = vmatpush.msra.mxu0 %v1180
    %1206 = vmatpush.msra.mxu0 %v1179
    %1207 = vmatmul.f32.gmra.mxu0 %v1186
    %v1208 = vpop.f32.mrf.mxu0
    %v1209 = vadd.f32 %v1184, %v1208
    %1210 = vmatmul.f32.gmra.mxu0 %v1189
    %v1211 = vpop.f32.mrf.mxu0
    %v1212 = vadd.f32 %v1184, %v1211
    %1213 = vdwg.mxu0
    %1216 = vrot.lane.b32.xlu0 %v1209, 120
    %v1217 = vpop.permute.xlu0 %1216
    %1218 = vrot.lane.b32.xlu0 %v1212, 120
    %v1219 = vpop.permute.xlu0 %1218
    %1220 = vrot.lane.b32.xlu0 %v1209, 112
    %v1221 = vpop.permute.xlu0 %1220
    %1222 = vrot.lane.b32.xlu0 %v1212, 112
    %v1223 = vpop.permute.xlu0 %1222
    %1224 = vrot.lane.b32.xlu0 %v1209, 104
    %v1225 = vpop.permute.xlu0 %1224
    %1226 = vrot.lane.b32.xlu0 %v1212, 104
    %v1227 = vpop.permute.xlu0 %1226
    %1228 = vrot.lane.b32.xlu0 %v1209, 96
    %v1229 = vpop.permute.xlu0 %1228
    %v1230 = vsel %vm237, %v1209, 0
    %v1232 = vsel %vm237, %v1229, 0
    %1234 = vmatpush.xpose.msra.mxu0 0.0
    %1235 = vmatpush.xpose.msra.mxu0 0.0
    %1236 = vmatpush.xpose.msra.mxu0 0.0
    %1237 = vmatpush.xpose.msra.mxu0 0.0
    %1238 = vmatpush.xpose.msra.mxu0 0.0
    %1239 = vmatpush.xpose.msra.mxu0 0.0
    %1240 = vmatpush.xpose.msra.mxu0 0.0
    %1241 = vmatpush.xpose.msra.mxu0 0.0
    %1242 = vmatpush.xpose.msra.mxu0 0.0
    %1243 = vmatpush.xpose.msra.mxu0 0.0
    %1244 = vmatpush.xpose.msra.mxu0 0.0
    %1245 = vmatpush.xpose.msra.mxu0 0.0
    %1246 = vmatpush.xpose.msra.mxu0 0.0
    %1247 = vmatpush.xpose.msra.mxu0 0.0
    %1248 = vmatpush.xpose.msra.mxu0 0.0
    %1249 = vmatpush.xpose.msra.mxu0 %v1232
    %1250 = vmatmul.f32.gmra.mxu0 %v1230
    %v1251 = vpop.f32.mrf.mxu0
    %v1252 = vadd.f32 0.0, %v1251
    %1253 = vdwg.mxu0
    %1254 = vrot.lane.b32.xlu0 %v1212, 96
    %v1255 = vpop.permute.xlu0 %1254
    %v1256 = vsel %vm237, %v1212, 0
    %v1258 = vsel %vm237, %v1255, 0
    %1260 = vmatpush.xpose.msra.mxu0 0.0
    %1261 = vmatpush.xpose.msra.mxu0 0.0
    %1262 = vmatpush.xpose.msra.mxu0 0.0
    %1263 = vmatpush.xpose.msra.mxu0 0.0
    %1264 = vmatpush.xpose.msra.mxu0 0.0
    %1265 = vmatpush.xpose.msra.mxu0 0.0
    %1266 = vmatpush.xpose.msra.mxu0 0.0
    %1267 = vmatpush.xpose.msra.mxu0 0.0
    %1268 = vmatpush.xpose.msra.mxu0 0.0
    %1269 = vmatpush.xpose.msra.mxu0 0.0
    %1270 = vmatpush.xpose.msra.mxu0 0.0
    %1271 = vmatpush.xpose.msra.mxu0 0.0
    %1272 = vmatpush.xpose.msra.mxu0 0.0
    %1273 = vmatpush.xpose.msra.mxu0 0.0
    %1274 = vmatpush.xpose.msra.mxu0 0.0
    %1275 = vmatpush.xpose.msra.mxu0 %v1258
    %1276 = vmatmul.f32.gmra.mxu0 %v1256
    %v1277 = vpop.f32.mrf.mxu0
    %v1278 = vadd.f32 0.0, %v1277
    %1279 = vdwg.mxu0
    %1280 = vrot.lane.b32.xlu0 %v1217, 96
    %v1281 = vpop.permute.xlu0 %1280
    %v1282 = vsel %vm237, %v1217, 0
    %v1284 = vsel %vm237, %v1281, 0
    %1286 = vmatpush.xpose.msra.mxu0 0.0
    %1287 = vmatpush.xpose.msra.mxu0 0.0
    %1288 = vmatpush.xpose.msra.mxu0 0.0
    %1289 = vmatpush.xpose.msra.mxu0 0.0
    %1290 = vmatpush.xpose.msra.mxu0 0.0
    %1291 = vmatpush.xpose.msra.mxu0 0.0
    %1292 = vmatpush.xpose.msra.mxu0 0.0
    %1293 = vmatpush.xpose.msra.mxu0 0.0
    %1294 = vmatpush.xpose.msra.mxu0 0.0
    %1295 = vmatpush.xpose.msra.mxu0 0.0
    %1296 = vmatpush.xpose.msra.mxu0 0.0
    %1297 = vmatpush.xpose.msra.mxu0 0.0
    %1298 = vmatpush.xpose.msra.mxu0 0.0
    %1299 = vmatpush.xpose.msra.mxu0 0.0
    %1300 = vmatpush.xpose.msra.mxu0 0.0
    %1301 = vmatpush.xpose.msra.mxu0 %v1284
    %1302 = vmatmul.f32.gmra.mxu0 %v1282
    %v1303 = vpop.f32.mrf.mxu0
    %v1304 = vadd.f32 0.0, %v1303
    %1305 = vdwg.mxu0
    %1306 = vrot.lane.b32.xlu0 %v1219, 96
    %v1307 = vpop.permute.xlu0 %1306
    %v1308 = vsel %vm237, %v1219, 0
    %v1310 = vsel %vm237, %v1307, 0
    %1312 = vmatpush.xpose.msra.mxu0 0.0
    %1313 = vmatpush.xpose.msra.mxu0 0.0
    %1314 = vmatpush.xpose.msra.mxu0 0.0
    %1315 = vmatpush.xpose.msra.mxu0 0.0
    %1316 = vmatpush.xpose.msra.mxu0 0.0
    %1317 = vmatpush.xpose.msra.mxu0 0.0
    %1318 = vmatpush.xpose.msra.mxu0 0.0
    %1319 = vmatpush.xpose.msra.mxu0 0.0
    %1320 = vmatpush.xpose.msra.mxu0 0.0
    %1321 = vmatpush.xpose.msra.mxu0 0.0
    %1322 = vmatpush.xpose.msra.mxu0 0.0
    %1323 = vmatpush.xpose.msra.mxu0 0.0
    %1324 = vmatpush.xpose.msra.mxu0 0.0
    %1325 = vmatpush.xpose.msra.mxu0 0.0
    %1326 = vmatpush.xpose.msra.mxu0 0.0
    %1327 = vmatpush.xpose.msra.mxu0 %v1310
    %1328 = vmatmul.f32.gmra.mxu0 %v1308
    %v1329 = vpop.f32.mrf.mxu0
    %v1330 = vadd.f32 0.0, %v1329
    %1331 = vdwg.mxu0
    %1332 = vrot.lane.b32.xlu0 %v1221, 96
    %v1333 = vpop.permute.xlu0 %1332
    %v1334 = vsel %vm237, %v1221, 0
    %v1336 = vsel %vm237, %v1333, 0
    %1338 = vmatpush.xpose.msra.mxu0 0.0
    %1339 = vmatpush.xpose.msra.mxu0 0.0
    %1340 = vmatpush.xpose.msra.mxu0 0.0
    %1341 = vmatpush.xpose.msra.mxu0 0.0
    %1342 = vmatpush.xpose.msra.mxu0 0.0
    %1343 = vmatpush.xpose.msra.mxu0 0.0
    %1344 = vmatpush.xpose.msra.mxu0 0.0
    %1345 = vmatpush.xpose.msra.mxu0 0.0
    %1346 = vmatpush.xpose.msra.mxu0 0.0
    %1347 = vmatpush.xpose.msra.mxu0 0.0
    %1348 = vmatpush.xpose.msra.mxu0 0.0
    %1349 = vmatpush.xpose.msra.mxu0 0.0
    %1350 = vmatpush.xpose.msra.mxu0 0.0
    %1351 = vmatpush.xpose.msra.mxu0 0.0
    %1352 = vmatpush.xpose.msra.mxu0 0.0
    %1353 = vmatpush.xpose.msra.mxu0 %v1336
    %1354 = vmatmul.f32.gmra.mxu0 %v1334
    %v1355 = vpop.f32.mrf.mxu0
    %v1356 = vadd.f32 0.0, %v1355
    %1357 = vdwg.mxu0
    %1358 = vrot.lane.b32.xlu0 %v1223, 96
    %v1359 = vpop.permute.xlu0 %1358
    %v1360 = vsel %vm237, %v1223, 0
    %v1362 = vsel %vm237, %v1359, 0
    %1364 = vmatpush.xpose.msra.mxu0 0.0
    %1365 = vmatpush.xpose.msra.mxu0 0.0
    %1366 = vmatpush.xpose.msra.mxu0 0.0
    %1367 = vmatpush.xpose.msra.mxu0 0.0
    %1368 = vmatpush.xpose.msra.mxu0 0.0
    %1369 = vmatpush.xpose.msra.mxu0 0.0
    %1370 = vmatpush.xpose.msra.mxu0 0.0
    %1371 = vmatpush.xpose.msra.mxu0 0.0
    %1372 = vmatpush.xpose.msra.mxu0 0.0
    %1373 = vmatpush.xpose.msra.mxu0 0.0
    %1374 = vmatpush.xpose.msra.mxu0 0.0
    %1375 = vmatpush.xpose.msra.mxu0 0.0
    %1376 = vmatpush.xpose.msra.mxu0 0.0
    %1377 = vmatpush.xpose.msra.mxu0 0.0
    %1378 = vmatpush.xpose.msra.mxu0 0.0
    %1379 = vmatpush.xpose.msra.mxu0 %v1362
    %1380 = vmatmul.f32.gmra.mxu0 %v1360
    %v1381 = vpop.f32.mrf.mxu0
    %v1382 = vadd.f32 0.0, %v1381
    %1383 = vdwg.mxu0
    %1384 = vrot.lane.b32.xlu0 %v1225, 96
    %v1385 = vpop.permute.xlu0 %1384
    %v1386 = vsel %vm237, %v1225, 0
    %v1388 = vsel %vm237, %v1385, 0
    %1390 = vmatpush.xpose.msra.mxu0 0.0
    %1391 = vmatpush.xpose.msra.mxu0 0.0
    %1392 = vmatpush.xpose.msra.mxu0 0.0
    %1393 = vmatpush.xpose.msra.mxu0 0.0
    %1394 = vmatpush.xpose.msra.mxu0 0.0
    %1395 = vmatpush.xpose.msra.mxu0 0.0
    %1396 = vmatpush.xpose.msra.mxu0 0.0
    %1397 = vmatpush.xpose.msra.mxu0 0.0
    %1398 = vmatpush.xpose.msra.mxu0 0.0
    %1399 = vmatpush.xpose.msra.mxu0 0.0
    %1400 = vmatpush.xpose.msra.mxu0 0.0
    %1401 = vmatpush.xpose.msra.mxu0 0.0
    %1402 = vmatpush.xpose.msra.mxu0 0.0
    %1403 = vmatpush.xpose.msra.mxu0 0.0
    %1404 = vmatpush.xpose.msra.mxu0 0.0
    %1405 = vmatpush.xpose.msra.mxu0 %v1388
    %1406 = vmatmul.f32.gmra.mxu0 %v1386
    %v1407 = vpop.f32.mrf.mxu0
    %v1408 = vadd.f32 0.0, %v1407
    %1409 = vdwg.mxu0
    %1410 = vrot.lane.b32.xlu0 %v1227, 96
    %v1411 = vpop.permute.xlu0 %1410
    %v1412 = vsel %vm237, %v1227, 0
    %v1414 = vsel %vm237, %v1411, 0
    %1416 = vmatpush.xpose.msra.mxu0 0.0
    %1417 = vmatpush.xpose.msra.mxu0 0.0
    %1418 = vmatpush.xpose.msra.mxu0 0.0
    %1419 = vmatpush.xpose.msra.mxu0 0.0
    %1420 = vmatpush.xpose.msra.mxu0 0.0
    %1421 = vmatpush.xpose.msra.mxu0 0.0
    %1422 = vmatpush.xpose.msra.mxu0 0.0
    %1423 = vmatpush.xpose.msra.mxu0 0.0
    %1424 = vmatpush.xpose.msra.mxu0 0.0
    %1425 = vmatpush.xpose.msra.mxu0 0.0
    %1426 = vmatpush.xpose.msra.mxu0 0.0
    %1427 = vmatpush.xpose.msra.mxu0 0.0
    %1428 = vmatpush.xpose.msra.mxu0 0.0
    %1429 = vmatpush.xpose.msra.mxu0 0.0
    %1430 = vmatpush.xpose.msra.mxu0 0.0
    %1431 = vmatpush.xpose.msra.mxu0 %v1414
    %1432 = vmatmul.f32.gmra.mxu0 %v1412
    %v1433 = vpop.f32.mrf.mxu0
    %v1434 = vadd.f32 0.0, %v1433
    %1435 = vdwg.mxu0
    %v1436 = vmul.f32 %v1252, 0.35355338
    %v1437 = vmul.f32 %v1278, 0.35355338
    %v1438 = vmul.f32 %v1304, 0.35355338
    %v1439 = vmul.f32 %v1330, 0.35355338
    %v1440 = vmul.f32 %v1356, 0.35355338
    %v1441 = vmul.f32 %v1382, 0.35355338
    %v1442 = vmul.f32 %v1408, 0.35355338
    %v1443 = vmul.f32 %v1434, 0.35355338
    %v1444 = vadd.f32 %v1436, %v90
    %v1445 = vadd.f32 %v1437, %v91
    %v1446 = vadd.f32 %v1438, %v90
    %v1447 = vadd.f32 %v1439, %v91
    %v1448 = vadd.f32 %v1440, %v90
    %v1449 = vadd.f32 %v1441, %v91
    %v1450 = vadd.f32 %v1442, %v90
    %v1451 = vadd.f32 %v1443, %v91
    %v1452 = vsel %vm237, %v1444, -inf
    %1453 = vmax.xlane.f32.xlu0 %v1452
    %v1454 = vpop.xlane.xlu0 %1453
    %v1455 = vsel %vm237, %v1445, -inf
    %1456 = vmax.xlane.f32.xlu0 %v1455
    %v1457 = vpop.xlane.xlu0 %1456
    %v1458 = vsel %vm237, %v1446, -inf
    %1459 = vmax.xlane.f32.xlu0 %v1458
    %v1460 = vpop.xlane.xlu0 %1459
    %v1461 = vsel %vm237, %v1447, -inf
    %1462 = vmax.xlane.f32.xlu0 %v1461
    %v1463 = vpop.xlane.xlu0 %1462
    %v1464 = vsel %vm237, %v1448, -inf
    %1465 = vmax.xlane.f32.xlu0 %v1464
    %v1466 = vpop.xlane.xlu0 %1465
    %v1467 = vsel %vm237, %v1449, -inf
    %1468 = vmax.xlane.f32.xlu0 %v1467
    %v1469 = vpop.xlane.xlu0 %1468
    %v1470 = vsel %vm237, %v1450, -inf
    %1471 = vmax.xlane.f32.xlu0 %v1470
    %v1472 = vpop.xlane.xlu0 %1471
    %v1473 = vsel %vm237, %v1451, -inf
    %1474 = vmax.xlane.f32.xlu0 %v1473
    %v1475 = vpop.xlane.xlu0 %1474
    %v1476 = vsub.f32 %v1444, %v1454
    %v1477 = vsub.f32 %v1445, %v1457
    %v1478 = vsub.f32 %v1446, %v1460
    %v1479 = vsub.f32 %v1447, %v1463
    %v1480 = vsub.f32 %v1448, %v1466
    %v1481 = vsub.f32 %v1449, %v1469
    %v1482 = vsub.f32 %v1450, %v1472
    %v1483 = vsub.f32 %v1451, %v1475
    %v1484 = vmul.f32 %v1476, 1.442695
    %v1485 = vpow.pop %v1484
    %v1486 = vmul.f32 %v1477, 1.442695
    %v1487 = vpow.pop %v1486
    %v1488 = vmul.f32 %v1478, 1.442695
    %v1489 = vpow.pop %v1488
    %v1490 = vmul.f32 %v1479, 1.442695
    %v1491 = vpow.pop %v1490
    %v1492 = vmul.f32 %v1480, 1.442695
    %v1493 = vpow.pop %v1492
    %v1494 = vmul.f32 %v1481, 1.442695
    %v1495 = vpow.pop %v1494
    %v1496 = vmul.f32 %v1482, 1.442695
    %v1497 = vpow.pop %v1496
    %v1498 = vmul.f32 %v1483, 1.442695
    %v1499 = vpow.pop %v1498
    %v1500 = vsel %vm237, %v1485, 0.0
    %1501 = vadd.xlane.f32.xlu0 %v1500
    %v1502 = vpop.xlane.xlu0 %1501
    %v1503 = vsel %vm237, %v1487, 0.0
    %1504 = vadd.xlane.f32.xlu0 %v1503
    %v1505 = vpop.xlane.xlu0 %1504
    %v1506 = vsel %vm237, %v1489, 0.0
    %1507 = vadd.xlane.f32.xlu0 %v1506
    %v1508 = vpop.xlane.xlu0 %1507
    %v1509 = vsel %vm237, %v1491, 0.0
    %1510 = vadd.xlane.f32.xlu0 %v1509
    %v1511 = vpop.xlane.xlu0 %1510
    %v1512 = vsel %vm237, %v1493, 0.0
    %1513 = vadd.xlane.f32.xlu0 %v1512
    %v1514 = vpop.xlane.xlu0 %1513
    %v1515 = vsel %vm237, %v1495, 0.0
    %1516 = vadd.xlane.f32.xlu0 %v1515
    %v1517 = vpop.xlane.xlu0 %1516
    %v1518 = vsel %vm237, %v1497, 0.0
    %1519 = vadd.xlane.f32.xlu0 %v1518
    %v1520 = vpop.xlane.xlu0 %1519
    %v1521 = vsel %vm237, %v1499, 0.0
    %1522 = vadd.xlane.f32.xlu0 %v1521
    %v1523 = vpop.xlane.xlu0 %1522
    %v1524 = vrcp.pop %v1502
    %v1525 = vmul.f32 %v1502, %v1524
    %v1526 = vsub.f32 1.0, %v1525
    %v1527 = vmul.f32 %v1524, %v1526
    %v1528 = vadd.f32 %v1524, %v1527
    %vm1529 = vweird.f32 %v1502
    %vm1530 = vweird.f32 %v1524
    %vm1531 = vmor %vm1529, %vm1530
    %v1532 = vsel %vm1531, %v1524, %v1528
    %v1533 = vand.u32 2147483647, %v1502
    %vm1534 = vcmp.eq.f32.partialorder %v1533, 8.507059e+37
    %v1535 = vand.u32 %v1502, 2147483648
    %v1536 = vor.u32 1.1754944e-38, %v1535
    %v1537 = vsel %vm1534, %v1536, %v1532
    %v1538 = vmul.f32 %v1485, %v1537
    %v1539 = vrcp.pop %v1505
    %v1540 = vmul.f32 %v1505, %v1539
    %v1541 = vsub.f32 1.0, %v1540
    %v1542 = vmul.f32 %v1539, %v1541
    %v1543 = vadd.f32 %v1539, %v1542
    %vm1544 = vweird.f32 %v1505
    %vm1545 = vweird.f32 %v1539
    %vm1546 = vmor %vm1544, %vm1545
    %v1547 = vsel %vm1546, %v1539, %v1543
    %v1548 = vand.u32 2147483647, %v1505
    %vm1549 = vcmp.eq.f32.partialorder %v1548, 8.507059e+37
    %v1550 = vand.u32 %v1505, 2147483648
    %v1551 = vor.u32 1.1754944e-38, %v1550
    %v1552 = vsel %vm1549, %v1551, %v1547
    %v1553 = vmul.f32 %v1487, %v1552
    %v1554 = vrcp.pop %v1508
    %v1555 = vmul.f32 %v1508, %v1554
    %v1556 = vsub.f32 1.0, %v1555
    %v1557 = vmul.f32 %v1554, %v1556
    %v1558 = vadd.f32 %v1554, %v1557
    %vm1559 = vweird.f32 %v1508
    %vm1560 = vweird.f32 %v1554
    %vm1561 = vmor %vm1559, %vm1560
    %v1562 = vsel %vm1561, %v1554, %v1558
    %v1563 = vand.u32 2147483647, %v1508
    %vm1564 = vcmp.eq.f32.partialorder %v1563, 8.507059e+37
    %v1565 = vand.u32 %v1508, 2147483648
    %v1566 = vor.u32 1.1754944e-38, %v1565
    %v1567 = vsel %vm1564, %v1566, %v1562
    %v1568 = vmul.f32 %v1489, %v1567
    %v1569 = vrcp.pop %v1511
    %v1570 = vmul.f32 %v1511, %v1569
    %v1571 = vsub.f32 1.0, %v1570
    %v1572 = vmul.f32 %v1569, %v1571
    %v1573 = vadd.f32 %v1569, %v1572
    %vm1574 = vweird.f32 %v1511
    %vm1575 = vweird.f32 %v1569
    %vm1576 = vmor %vm1574, %vm1575
    %v1577 = vsel %vm1576, %v1569, %v1573
    %v1578 = vand.u32 2147483647, %v1511
    %vm1579 = vcmp.eq.f32.partialorder %v1578, 8.507059e+37
    %v1580 = vand.u32 %v1511, 2147483648
    %v1581 = vor.u32 1.1754944e-38, %v1580
    %v1582 = vsel %vm1579, %v1581, %v1577
    %v1583 = vmul.f32 %v1491, %v1582
    %v1584 = vrcp.pop %v1514
    %v1585 = vmul.f32 %v1514, %v1584
    %v1586 = vsub.f32 1.0, %v1585
    %v1587 = vmul.f32 %v1584, %v1586
    %v1588 = vadd.f32 %v1584, %v1587
    %vm1589 = vweird.f32 %v1514
    %vm1590 = vweird.f32 %v1584
    %vm1591 = vmor %vm1589, %vm1590
    %v1592 = vsel %vm1591, %v1584, %v1588
    %v1593 = vand.u32 2147483647, %v1514
    %vm1594 = vcmp.eq.f32.partialorder %v1593, 8.507059e+37
    %v1595 = vand.u32 %v1514, 2147483648
    %v1596 = vor.u32 1.1754944e-38, %v1595
    %v1597 = vsel %vm1594, %v1596, %v1592
    %v1598 = vmul.f32 %v1493, %v1597
    %v1599 = vrcp.pop %v1517
    %v1600 = vmul.f32 %v1517, %v1599
    %v1601 = vsub.f32 1.0, %v1600
    %v1602 = vmul.f32 %v1599, %v1601
    %v1603 = vadd.f32 %v1599, %v1602
    %vm1604 = vweird.f32 %v1517
    %vm1605 = vweird.f32 %v1599
    %vm1606 = vmor %vm1604, %vm1605
    %v1607 = vsel %vm1606, %v1599, %v1603
    %v1608 = vand.u32 2147483647, %v1517
    %vm1609 = vcmp.eq.f32.partialorder %v1608, 8.507059e+37
    %v1610 = vand.u32 %v1517, 2147483648
    %v1611 = vor.u32 1.1754944e-38, %v1610
    %v1612 = vsel %vm1609, %v1611, %v1607
    %v1613 = vmul.f32 %v1495, %v1612
    %v1614 = vrcp.pop %v1520
    %v1615 = vmul.f32 %v1520, %v1614
    %v1616 = vsub.f32 1.0, %v1615
    %v1617 = vmul.f32 %v1614, %v1616
    %v1618 = vadd.f32 %v1614, %v1617
    %vm1619 = vweird.f32 %v1520
    %vm1620 = vweird.f32 %v1614
    %vm1621 = vmor %vm1619, %vm1620
    %v1622 = vsel %vm1621, %v1614, %v1618
    %v1623 = vand.u32 2147483647, %v1520
    %vm1624 = vcmp.eq.f32.partialorder %v1623, 8.507059e+37
    %v1625 = vand.u32 %v1520, 2147483648
    %v1626 = vor.u32 1.1754944e-38, %v1625
    %v1627 = vsel %vm1624, %v1626, %v1622
    %v1628 = vmul.f32 %v1497, %v1627
    %v1629 = vrcp.pop %v1523
    %v1630 = vmul.f32 %v1523, %v1629
    %v1631 = vsub.f32 1.0, %v1630
    %v1632 = vmul.f32 %v1629, %v1631
    %v1633 = vadd.f32 %v1629, %v1632
    %vm1634 = vweird.f32 %v1523
    %vm1635 = vweird.f32 %v1629
    %vm1636 = vmor %vm1634, %vm1635
    %v1637 = vsel %vm1636, %v1629, %v1633
    %v1638 = vand.u32 2147483647, %v1523
    %vm1639 = vcmp.eq.f32.partialorder %v1638, 8.507059e+37
    %v1640 = vand.u32 %v1523, 2147483648
    %v1641 = vor.u32 1.1754944e-38, %v1640
    %v1642 = vsel %vm1639, %v1641, %v1637
    %v1643 = vmul.f32 %v1499, %v1642
    %1644 = vrot.lane.b32.xlu0 %v1209, 64
    %v1645 = vpop.permute.xlu0 %1644
    %v1648 = vsel %vm237, %v1538, 0
    %1650 = vmatpush.msra.mxu0 0.0
    %1651 = vmatpush.msra.mxu0 0.0
    %1652 = vmatpush.msra.mxu0 0.0
    %1653 = vmatpush.msra.mxu0 0.0
    %1654 = vmatpush.msra.mxu0 0.0
    %1655 = vmatpush.msra.mxu0 0.0
    %1656 = vmatpush.msra.mxu0 0.0
    %1657 = vmatpush.msra.mxu0 0.0
    %1658 = vmatpush.msra.mxu0 0.0
    %1659 = vmatpush.msra.mxu0 0.0
    %1660 = vmatpush.msra.mxu0 0.0
    %1661 = vmatpush.msra.mxu0 0.0
    %1662 = vmatpush.msra.mxu0 0.0
    %1663 = vmatpush.msra.mxu0 0.0
    %1664 = vmatpush.msra.mxu0 0.0
    %1665 = vmatpush.msra.mxu0 %v1645
    %1666 = vmatmul.f32.gmra.mxu0 %v1648
    %v1667 = vpop.f32.mrf.mxu0
    %v1668 = vadd.f32 0.0, %v1667
    %1669 = vdwg.mxu0
    %1670 = vrot.lane.b32.xlu0 %v1212, 64
    %v1671 = vpop.permute.xlu0 %1670
    %v1674 = vsel %vm237, %v1553, 0
    %1676 = vmatpush.msra.mxu0 0.0
    %1677 = vmatpush.msra.mxu0 0.0
    %1678 = vmatpush.msra.mxu0 0.0
    %1679 = vmatpush.msra.mxu0 0.0
    %1680 = vmatpush.msra.mxu0 0.0
    %1681 = vmatpush.msra.mxu0 0.0
    %1682 = vmatpush.msra.mxu0 0.0
    %1683 = vmatpush.msra.mxu0 0.0
    %1684 = vmatpush.msra.mxu0 0.0
    %1685 = vmatpush.msra.mxu0 0.0
    %1686 = vmatpush.msra.mxu0 0.0
    %1687 = vmatpush.msra.mxu0 0.0
    %1688 = vmatpush.msra.mxu0 0.0
    %1689 = vmatpush.msra.mxu0 0.0
    %1690 = vmatpush.msra.mxu0 0.0
    %1691 = vmatpush.msra.mxu0 %v1671
    %1692 = vmatmul.f32.gmra.mxu0 %v1674
    %v1693 = vpop.f32.mrf.mxu0
    %v1694 = vadd.f32 0.0, %v1693
    %1695 = vdwg.mxu0
    %1696 = vrot.lane.b32.xlu0 %v1217, 64
    %v1697 = vpop.permute.xlu0 %1696
    %v1700 = vsel %vm237, %v1568, 0
    %1702 = vmatpush.msra.mxu0 0.0
    %1703 = vmatpush.msra.mxu0 0.0
    %1704 = vmatpush.msra.mxu0 0.0
    %1705 = vmatpush.msra.mxu0 0.0
    %1706 = vmatpush.msra.mxu0 0.0
    %1707 = vmatpush.msra.mxu0 0.0
    %1708 = vmatpush.msra.mxu0 0.0
    %1709 = vmatpush.msra.mxu0 0.0
    %1710 = vmatpush.msra.mxu0 0.0
    %1711 = vmatpush.msra.mxu0 0.0
    %1712 = vmatpush.msra.mxu0 0.0
    %1713 = vmatpush.msra.mxu0 0.0
    %1714 = vmatpush.msra.mxu0 0.0
    %1715 = vmatpush.msra.mxu0 0.0
    %1716 = vmatpush.msra.mxu0 0.0
    %1717 = vmatpush.msra.mxu0 %v1697
    %1718 = vmatmul.f32.gmra.mxu0 %v1700
    %v1719 = vpop.f32.mrf.mxu0
    %v1720 = vadd.f32 0.0, %v1719
    %1721 = vdwg.mxu0
    %1722 = vrot.lane.b32.xlu0 %v1219, 64
    %v1723 = vpop.permute.xlu0 %1722
    %v1726 = vsel %vm237, %v1583, 0
    %1728 = vmatpush.msra.mxu0 0.0
    %1729 = vmatpush.msra.mxu0 0.0
    %1730 = vmatpush.msra.mxu0 0.0
    %1731 = vmatpush.msra.mxu0 0.0
    %1732 = vmatpush.msra.mxu0 0.0
    %1733 = vmatpush.msra.mxu0 0.0
    %1734 = vmatpush.msra.mxu0 0.0
    %1735 = vmatpush.msra.mxu0 0.0
    %1736 = vmatpush.msra.mxu0 0.0
    %1737 = vmatpush.msra.mxu0 0.0
    %1738 = vmatpush.msra.mxu0 0.0
    %1739 = vmatpush.msra.mxu0 0.0
    %1740 = vmatpush.msra.mxu0 0.0
    %1741 = vmatpush.msra.mxu0 0.0
    %1742 = vmatpush.msra.mxu0 0.0
    %1743 = vmatpush.msra.mxu0 %v1723
    %1744 = vmatmul.f32.gmra.mxu0 %v1726
    %v1745 = vpop.f32.mrf.mxu0
    %v1746 = vadd.f32 0.0, %v1745
    %1747 = vdwg.mxu0
    %1748 = vrot.lane.b32.xlu0 %v1221, 64
    %v1749 = vpop.permute.xlu0 %1748
    %v1752 = vsel %vm237, %v1598, 0
    %1754 = vmatpush.msra.mxu0 0.0
    %1755 = vmatpush.msra.mxu0 0.0
    %1756 = vmatpush.msra.mxu0 0.0
    %1757 = vmatpush.msra.mxu0 0.0
    %1758 = vmatpush.msra.mxu0 0.0
    %1759 = vmatpush.msra.mxu0 0.0
    %1760 = vmatpush.msra.mxu0 0.0
    %1761 = vmatpush.msra.mxu0 0.0
    %1762 = vmatpush.msra.mxu0 0.0
    %1763 = vmatpush.msra.mxu0 0.0
    %1764 = vmatpush.msra.mxu0 0.0
    %1765 = vmatpush.msra.mxu0 0.0
    %1766 = vmatpush.msra.mxu0 0.0
    %1767 = vmatpush.msra.mxu0 0.0
    %1768 = vmatpush.msra.mxu0 0.0
    %1769 = vmatpush.msra.mxu0 %v1749
    %1770 = vmatmul.f32.gmra.mxu0 %v1752
    %v1771 = vpop.f32.mrf.mxu0
    %v1772 = vadd.f32 0.0, %v1771
    %1773 = vdwg.mxu0
    %1774 = vrot.lane.b32.xlu0 %v1223, 64
    %v1775 = vpop.permute.xlu0 %1774
    %v1778 = vsel %vm237, %v1613, 0
    %1780 = vmatpush.msra.mxu0 0.0
    %1781 = vmatpush.msra.mxu0 0.0
    %1782 = vmatpush.msra.mxu0 0.0
    %1783 = vmatpush.msra.mxu0 0.0
    %1784 = vmatpush.msra.mxu0 0.0
    %1785 = vmatpush.msra.mxu0 0.0
    %1786 = vmatpush.msra.mxu0 0.0
    %1787 = vmatpush.msra.mxu0 0.0
    %1788 = vmatpush.msra.mxu0 0.0
    %1789 = vmatpush.msra.mxu0 0.0
    %1790 = vmatpush.msra.mxu0 0.0
    %1791 = vmatpush.msra.mxu0 0.0
    %1792 = vmatpush.msra.mxu0 0.0
    %1793 = vmatpush.msra.mxu0 0.0
    %1794 = vmatpush.msra.mxu0 0.0
    %1795 = vmatpush.msra.mxu0 %v1775
    %1796 = vmatmul.f32.gmra.mxu0 %v1778
    %v1797 = vpop.f32.mrf.mxu0
    %v1798 = vadd.f32 0.0, %v1797
    %1799 = vdwg.mxu0
    %1800 = vrot.lane.b32.xlu0 %v1225, 64
    %v1801 = vpop.permute.xlu0 %1800
    %v1804 = vsel %vm237, %v1628, 0
    %1806 = vmatpush.msra.mxu0 0.0
    %1807 = vmatpush.msra.mxu0 0.0
    %1808 = vmatpush.msra.mxu0 0.0
    %1809 = vmatpush.msra.mxu0 0.0
    %1810 = vmatpush.msra.mxu0 0.0
    %1811 = vmatpush.msra.mxu0 0.0
    %1812 = vmatpush.msra.mxu0 0.0
    %1813 = vmatpush.msra.mxu0 0.0
    %1814 = vmatpush.msra.mxu0 0.0
    %1815 = vmatpush.msra.mxu0 0.0
    %1816 = vmatpush.msra.mxu0 0.0
    %1817 = vmatpush.msra.mxu0 0.0
    %1818 = vmatpush.msra.mxu0 0.0
    %1819 = vmatpush.msra.mxu0 0.0
    %1820 = vmatpush.msra.mxu0 0.0
    %1821 = vmatpush.msra.mxu0 %v1801
    %1822 = vmatmul.f32.gmra.mxu0 %v1804
    %v1823 = vpop.f32.mrf.mxu0
    %v1824 = vadd.f32 0.0, %v1823
    %1825 = vdwg.mxu0
    %1826 = vrot.lane.b32.xlu0 %v1227, 64
    %v1827 = vpop.permute.xlu0 %1826
    %v1830 = vsel %vm237, %v1643, 0
    %1832 = vmatpush.msra.mxu0 0.0
    %1833 = vmatpush.msra.mxu0 0.0
    %1834 = vmatpush.msra.mxu0 0.0
    %1835 = vmatpush.msra.mxu0 0.0
    %1836 = vmatpush.msra.mxu0 0.0
    %1837 = vmatpush.msra.mxu0 0.0
    %1838 = vmatpush.msra.mxu0 0.0
    %1839 = vmatpush.msra.mxu0 0.0
    %1840 = vmatpush.msra.mxu0 0.0
    %1841 = vmatpush.msra.mxu0 0.0
    %1842 = vmatpush.msra.mxu0 0.0
    %1843 = vmatpush.msra.mxu0 0.0
    %1844 = vmatpush.msra.mxu0 0.0
    %1845 = vmatpush.msra.mxu0 0.0
    %1846 = vmatpush.msra.mxu0 0.0
    %1847 = vmatpush.msra.mxu0 %v1827
    %1848 = vmatmul.f32.gmra.mxu0 %v1830
    %v1849 = vpop.f32.mrf.mxu0
    %v1850 = vadd.f32 0.0, %v1849
    %1851 = vdwg.mxu0
    %1854 = vrot.lane.b32.xlu0 %v1720, 8
    %v1855 = vpop.permute.xlu0 %1854
    %1856 = vrot.lane.b32.xlu0 %v1746, 8
    %v1857 = vpop.permute.xlu0 %1856
    %1862 = vrot.lane.b32.xlu0 %v1772, 16
    %v1863 = vpop.permute.xlu0 %1862
    %1864 = vrot.lane.b32.xlu0 %v1798, 16
    %v1865 = vpop.permute.xlu0 %1864
    %1870 = vrot.lane.b32.xlu0 %v1824, 24
    %v1871 = vpop.permute.xlu0 %1870
    %1872 = vrot.lane.b32.xlu0 %v1850, 24
    %v1873 = vpop.permute.xlu0 %1872
    %v1876 = vsel %vm237, %v1668, %v1855
    %v1877 = vsel %vm237, %v1694, %v1857
    %v1878 = vsel %vm886, %v1876, %v1863
    %v1879 = vsel %vm886, %v1877, %v1865
    %v1880 = vsel %vm889, %v1878, %v1871
    %v1881 = vsel %vm889, %v1879, %v1873
    %v1882 = vld [vmem:[#allocation2 + $0x118] sm:$0xff]
    %v1883 = vld [vmem:[#allocation2 + $0x120] sm:$0xff]
    %v1884 = vld [vmem:[#allocation2 + $0x128] sm:$0xff]
    %v1885 = vld [vmem:[#allocation2 + $0x130] sm:$0xff]
    %v1887 = vsel %vm96, %v1880, 0
    %v1890 = vsel %vm96, %v1881, 0
    %1892 = vmatpush.msra.mxu0 0.0
    %1893 = vmatpush.msra.mxu0 0.0
    %1894 = vmatpush.msra.mxu0 0.0
    %1895 = vmatpush.msra.mxu0 0.0
    %1896 = vmatpush.msra.mxu0 0.0
    %1897 = vmatpush.msra.mxu0 0.0
    %1898 = vmatpush.msra.mxu0 0.0
    %1899 = vmatpush.msra.mxu0 0.0
    %1900 = vmatpush.msra.mxu0 0.0
    %1901 = vmatpush.msra.mxu0 0.0
    %1902 = vmatpush.msra.mxu0 0.0
    %1903 = vmatpush.msra.mxu0 0.0
    %1904 = vmatpush.msra.mxu0 %v1885
    %1905 = vmatpush.msra.mxu0 %v1884
    %1906 = vmatpush.msra.mxu0 %v1883
    %1907 = vmatpush.msra.mxu0 %v1882
    %1908 = vmatmul.f32.gmra.mxu0 %v1887
    %v1909 = vpop.f32.mrf.mxu0
    %v1910 = vadd.f32 0.0, %v1909
    %1911 = vmatmul.f32.gmra.mxu0 %v1890
    %v1912 = vpop.f32.mrf.mxu0
    %v1913 = vadd.f32 0.0, %v1912
    %1914 = vdwg.mxu0
    %v1915 = vadd.f32 %v1093, %v1910
    %v1916 = vadd.f32 %v1094, %v1913
    %v1917 = vld [vmem:[#allocation2 + $0x19d] sm:$0x1]
    %v1918 = vperm.slane %v1917, 0
    %v1919 = vadd.f32 %v1915, %v1918
    %v1920 = vadd.f32 %v1916, %v1918
    %v1921 = vld [vmem:[#allocation2 + $0x19a] sm:$0x1]
    %v1922 = vld [vmem:[#allocation2 + $0x19b] sm:$0x1]
    %v1923 = vsel %vm96, %v1919, 0.0
    %1924 = vadd.xlane.f32.xlu0 %v1923
    %v1925 = vpop.xlane.xlu0 %1924
    %v1926 = vsel %vm96, %v1920, 0.0
    %1927 = vadd.xlane.f32.xlu0 %v1926
    %v1928 = vpop.xlane.xlu0 %1927
    %v1929 = vmul.f32 %v1925, %v109
    %v1930 = vmul.f32 %v1928, %v109
    %v1931 = vsub.f32 %v1919, %v1929
    %v1932 = vsub.f32 %v1920, %v1930
    %v1933 = vmul.f32 %v1931, %v1931
    %v1934 = vmul.f32 %v1932, %v1932
    %v1935 = vsel %vm96, %v1933, 0.0
    %1936 = vadd.xlane.f32.xlu0 %v1935
    %v1937 = vpop.xlane.xlu0 %1936
    %v1938 = vsel %vm96, %v1934, 0.0
    %1939 = vadd.xlane.f32.xlu0 %v1938
    %v1940 = vpop.xlane.xlu0 %1939
    %v1941 = vmul.f32 %v1937, 0.032258064
    %v1942 = vmul.f32 %v1940, 0.032258064
    %v1943 = vperm.slane %v1921, 0
    %v1944 = vmul.f32 %v1943, %v1931
    %v1945 = vmul.f32 %v1943, %v1932
    %v1946 = vrsqrt.pop %v1941
    %v1947 = vmul.f32 %v1946, %v1941
    %v1948 = vmul.f32 %v1947, %v1946
    %v1949 = vmul.f32 0.5, %v1948
    %v1950 = vsub.f32 1.5, %v1949
    %v1951 = vmul.f32 %v1946, %v1950
    %v1952 = vmul.f32 %v1941, %v1951
    %vm1953 = vcmp.eq.f32.partialorder %v1941, inf
    %v1954 = vsel %vm1953, %v1941, %v1952
    %vm1955 = vcmp.eq.f32.partialorder %v1941, 0.0
    %v1956 = vand.u32 %v1941, 2147483648
    %v1957 = vsel %vm1955, %v1956, %v1954
    %v1958 = vrsqrt.pop %v1942
    %v1959 = vmul.f32 %v1958, %v1942
    %v1960 = vmul.f32 %v1959, %v1958
    %v1961 = vmul.f32 0.5, %v1960
    %v1962 = vsub.f32 1.5, %v1961
    %v1963 = vmul.f32 %v1958, %v1962
    %v1964 = vmul.f32 %v1942, %v1963
    %vm1965 = vcmp.eq.f32.partialorder %v1942, inf
    %v1966 = vsel %vm1965, %v1942, %v1964
    %vm1967 = vcmp.eq.f32.partialorder %v1942, 0.0
    %v1968 = vand.u32 %v1942, 2147483648
    %v1969 = vsel %vm1967, %v1968, %v1966
    %v1970 = vadd.f32 %v1957, 1e-06
    %v1971 = vadd.f32 %v1969, 1e-06
    %v1972 = vrcp.pop %v1970
    %v1973 = vmul.f32 %v1970, %v1972
    %v1974 = vsub.f32 1.0, %v1973
    %v1975 = vmul.f32 %v1972, %v1974
    %v1976 = vadd.f32 %v1972, %v1975
    %vm1977 = vweird.f32 %v1970
    %vm1978 = vweird.f32 %v1972
    %vm1979 = vmor %vm1977, %vm1978
    %v1980 = vsel %vm1979, %v1972, %v1976
    %v1981 = vand.u32 2147483647, %v1970
    %vm1982 = vcmp.eq.f32.partialorder %v1981, 8.507059e+37
    %v1983 = vand.u32 %v1970, 2147483648
    %v1984 = vor.u32 1.1754944e-38, %v1983
    %v1985 = vsel %vm1982, %v1984, %v1980
    %v1986 = vmul.f32 %v1944, %v1985
    %v1987 = vrcp.pop %v1971
    %v1988 = vmul.f32 %v1971, %v1987
    %v1989 = vsub.f32 1.0, %v1988
    %v1990 = vmul.f32 %v1987, %v1989
    %v1991 = vadd.f32 %v1987, %v1990
    %vm1992 = vweird.f32 %v1971
    %vm1993 = vweird.f32 %v1987
    %vm1994 = vmor %vm1992, %vm1993
    %v1995 = vsel %vm1994, %v1987, %v1991
    %v1996 = vand.u32 2147483647, %v1971
    %vm1997 = vcmp.eq.f32.partialorder %v1996, 8.507059e+37
    %v1998 = vand.u32 %v1971, 2147483648
    %v1999 = vor.u32 1.1754944e-38, %v1998
    %v2000 = vsel %vm1997, %v1999, %v1995
    %v2001 = vmul.f32 %v1945, %v2000
    %v2002 = vperm.slane %v1922, 0
    %v2003 = vadd.f32 %v1986, %v2002
    %v2004 = vadd.f32 %v2001, %v2002
    %v2005 = vld [vmem:[#allocation2 + $0x138] sm:$0xff]
    %v2006 = vld [vmem:[#allocation2 + $0x140] sm:$0xff]
    %v2007 = vld [vmem:[#allocation2 + $0x148] sm:$0xff]
    %v2008 = vld [vmem:[#allocation2 + $0x150] sm:$0xff]
    %v2009 = vld [vmem:[#allocation2 + $0x19e] sm:$0x1]
    %v2010 = vperm.slane %v2009, 0
    %v2012 = vsel %vm96, %v2003, 0
    %v2015 = vsel %vm96, %v2004, 0
    %2017 = vmatpush.msra.mxu0 0.0
    %2018 = vmatpush.msra.mxu0 0.0
    %2019 = vmatpush.msra.mxu0 0.0
    %2020 = vmatpush.msra.mxu0 0.0
    %2021 = vmatpush.msra.mxu0 0.0
    %2022 = vmatpush.msra.mxu0 0.0
    %2023 = vmatpush.msra.mxu0 0.0
    %2024 = vmatpush.msra.mxu0 0.0
    %2025 = vmatpush.msra.mxu0 0.0
    %2026 = vmatpush.msra.mxu0 0.0
    %2027 = vmatpush.msra.mxu0 0.0
    %2028 = vmatpush.msra.mxu0 0.0
    %2029 = vmatpush.msra.mxu0 %v2008
    %2030 = vmatpush.msra.mxu0 %v2007
    %2031 = vmatpush.msra.mxu0 %v2006
    %2032 = vmatpush.msra.mxu0 %v2005
    %2033 = vmatmul.f32.gmra.mxu0 %v2012
    %v2034 = vpop.f32.mrf.mxu0
    %v2035 = vadd.f32 %v2010, %v2034
    %2036 = vmatmul.f32.gmra.mxu0 %v2015
    %v2037 = vpop.f32.mrf.mxu0
    %v2038 = vadd.f32 %v2010, %v2037
    %2039 = vdwg.mxu0
    %v2040 = vmax.f32 %v2035, 0.0
    %v2041 = vmax.f32 %v2038, 0.0
    %v2042 = vld [vmem:[#allocation2 + $0x158] sm:$0xff]
    %v2043 = vld [vmem:[#allocation2 + $0x160] sm:$0xff]
    %v2044 = vld [vmem:[#allocation2 + $0x168] sm:$0xff]
    %v2045 = vld [vmem:[#allocation2 + $0x170] sm:$0xff]
    %v2046 = vld [vmem:[#allocation2 + $0x178] sm:$0xff]
    %v2047 = vld [vmem:[#allocation2 + $0x180] sm:$0xff]
    %v2048 = vld [vmem:[#allocation2 + $0x188] sm:$0xff]
    %v2049 = vld [vmem:[#allocation2 + $0x190] sm:$0xff]
    %v2051 = vsel %vm57, %v2040, 0
    %v2054 = vsel %vm57, %v2041, 0
    %2056 = vmatpush.msra.mxu0 0.0
    %2057 = vmatpush.msra.mxu0 0.0
    %2058 = vmatpush.msra.mxu0 0.0
    %2059 = vmatpush.msra.mxu0 0.0
    %2060 = vmatpush.msra.mxu0 0.0
    %2061 = vmatpush.msra.mxu0 0.0
    %2062 = vmatpush.msra.mxu0 0.0
    %2063 = vmatpush.msra.mxu0 0.0
    %2064 = vmatpush.msra.mxu0 %v2049
    %2065 = vmatpush.msra.mxu0 %v2048
    %2066 = vmatpush.msra.mxu0 %v2047
    %2067 = vmatpush.msra.mxu0 %v2046
    %2068 = vmatpush.msra.mxu0 %v2045
    %2069 = vmatpush.msra.mxu0 %v2044
    %2070 = vmatpush.msra.mxu0 %v2043
    %2071 = vmatpush.msra.mxu0 %v2042
    %2072 = vmatmul.f32.gmra.mxu0 %v2051
    %v2073 = vpop.f32.mrf.mxu0
    %v2074 = vadd.f32 0.0, %v2073
    %2075 = vmatmul.f32.gmra.mxu0 %v2054
    %v2076 = vpop.f32.mrf.mxu0
    %v2077 = vadd.f32 0.0, %v2076
    %2078 = vdwg.mxu0
    %v2079 = vadd.f32 %v1919, %v2074
    %v2080 = vadd.f32 %v1920, %v2077
    %v2081 = vld [vmem:[#allocation2 + $0x19f] sm:$0x1]
    %v2082 = vperm.slane %v2081, 0
    %v2083 = vadd.f32 %v2079, %v2082
    %v2084 = vadd.f32 %v2080, %v2082
    %v2085 = vld [vmem:[#allocation2 + $0x1a0] sm:$0x1]
    %v2086 = vld [vmem:[#allocation2 + $0x1a1] sm:$0x1]
    %v2087 = vsel %vm96, %v2083, 0.0
    %2088 = vadd.xlane.f32.xlu0 %v2087
    %v2089 = vpop.xlane.xlu0 %2088
    %v2090 = vsel %vm96, %v2084, 0.0
    %2091 = vadd.xlane.f32.xlu0 %v2090
    %v2092 = vpop.xlane.xlu0 %2091
    %v2093 = vmul.f32 %v2089, %v109
    %v2094 = vmul.f32 %v2092, %v109
    %v2095 = vsub.f32 %v2083, %v2093
    %v2096 = vsub.f32 %v2084, %v2094
    %v2097 = vmul.f32 %v2095, %v2095
    %v2098 = vmul.f32 %v2096, %v2096
    %v2099 = vsel %vm96, %v2097, 0.0
    %2100 = vadd.xlane.f32.xlu0 %v2099
    %v2101 = vpop.xlane.xlu0 %2100
    %v2102 = vsel %vm96, %v2098, 0.0
    %2103 = vadd.xlane.f32.xlu0 %v2102
    %v2104 = vpop.xlane.xlu0 %2103
    %v2105 = vmul.f32 %v2101, %v109
    %v2106 = vmul.f32 %v2104, %v109
    %v2107 = vadd.f32 %v2105, 1e-05
    %v2108 = vadd.f32 %v2106, 1e-05
    %v2109 = vrsqrt.pop %v2107
    %v2110 = vmul.f32 %v2109, %v2107
    %v2111 = vmul.f32 %v2110, %v2109
    %v2112 = vmul.f32 0.5, %v2111
    %v2113 = vsub.f32 1.5, %v2112
    %v2114 = vmul.f32 %v2109, %v2113
    %vm2115 = vweird.f32 %v2107
    %vm2116 = vweird.f32 %v2109
    %vm2117 = vmor %vm2115, %vm2116
    %v2118 = vsel %vm2117, %v2109, %v2114
    %v2119 = vrsqrt.pop %v2108
    %v2120 = vmul.f32 %v2119, %v2108
    %v2121 = vmul.f32 %v2120, %v2119
    %v2122 = vmul.f32 0.5, %v2121
    %v2123 = vsub.f32 1.5, %v2122
    %v2124 = vmul.f32 %v2119, %v2123
    %vm2125 = vweird.f32 %v2108
    %vm2126 = vweird.f32 %v2119
    %vm2127 = vmor %vm2125, %vm2126
    %v2128 = vsel %vm2127, %v2119, %v2124
    %v2129 = vmul.f32 %v2095, %v2118
    %v2130 = vmul.f32 %v2096, %v2128
    %v2131 = vperm.slane %v2085, 0
    %v2132 = vmul.f32 %v2129, %v2131
    %v2133 = vmul.f32 %v2130, %v2131
    %v2134 = vperm.slane %v2086, 0
    %v2135 = vadd.f32 %v2132, %v2134
    %v2136 = vadd.f32 %v2133, %v2134
    %2137 = vst.msk [vmem:[#allocation5] sm:$0xff] %vm96, %v2135
    %2138 = vst.msk [vmem:[#allocation5 + $0x8] sm:$0xff] %vm96, %v2136
    // Predicated region
    $region18: #{encoder_forward.1} parent=1 // pred_check
      _
    $region19: #{encoder_forward.1} parent=1 // pred_check_branch
      %2140 = sbr.rel (0) target = $region21
    $region20: #{encoder_forward.1} parent=1 // pred_region
      %2142 = vsyncadd [#allocation4], 0
      %s2143 = sshll.u32 [#allocation5], 4
      %s2144 = int_to_ptr.vmem [resolvable:$true] %s2143
      %s2145 = sshll.u32 %s3, 4
      %s2146 = int_to_ptr.hbm [resolvable:$true] %s2145
      %2151 = dma.vmem_to_hbm [thread:$0]  %s2144, 256, %s2146, [#allocation4], 128, 128, 8
    $region21: #{encoder_forward.1} parent=1 // pred_fallthru
      _
    // Predicated region
    $region22: #{encoder_forward.1} parent=1 // pred_check
      _
    $region23: #{encoder_forward.1} parent=1 // pred_check_branch
      %2153 = sbr.rel (0) target = $region25
    $region24: #{encoder_forward.1} parent=1 // pred_region
      %2155 = dma.done [#allocation4], 256
    $region25: #{encoder_forward.1} parent=1 // pred_fallthru
      _
    %2156 = vsyncpa [#allocation3], 1
    %2157 = vsyncpa [#allocation4], 1

</llo_original>
